<compile_context>
chip_gen: v6e
topology: v6e:2x2x1
jax: 0.10.0
libtpu: 0.0.40
codegen_flags: <defaults>
</compile_context>

<pallas_src>
import jax
import jax.numpy as jnp
from jax import lax
from jax.experimental import pallas as pl
from jax.experimental.pallas import tpu as pltpu


# ---------------------------------------------------------------------------
# Static tap layout shared by the kernel builder and the mask builder.
# For pool offset (py, px) and conv tap (dy, dx):
#   input row = 2*yo + py + dy = 2*(yo + q) + ry   with q = (py+dy)//2, ry = (py+dy)%2
#   input col = 2*xo + px + dx = 2*(xo + s) + rx   with s = (px+dx)//2, rx = (px+dx)%2
# so the tap is a roll of the (ry, rx) space-to-depth slab by q*Wh + s on the
# pooled-grid lane axis, masked where (yo+q, xo+s) falls outside the image.
# ---------------------------------------------------------------------------
def _tap_layout(ks):
    r = (ks - 1) // 2
    taps = []                      # one list per pool offset, in (py, px) order
    qs_list = []                   # distinct nonzero (q, s) -> mask rows
    for py in (0, 1):
        for px in (0, 1):
            per = []
            for dy in range(-r, r + 1):        # (dy, dx) order MUST match wmat columns
                for dx in range(-r, r + 1):
                    ay, ax = py + dy, px + dx
                    ry, q = ay % 2, ay // 2
                    rx, s = ax % 2, ax // 2
                    if (q, s) != (0, 0) and (q, s) not in qs_list:
                        qs_list.append((q, s))
                    per.append((ry, rx, q, s))
            taps.append(per)
    return taps, qs_list


def _build_masks(Hh, Wh, Bt, qs_list):
    """(n_masks, Bt*Hh*Wh) f32 border masks on the pooled grid."""
    L = Bt * Hh * Wh
    if not qs_list:
        return jnp.ones((1, L), jnp.float32)
    p = jnp.arange(L, dtype=jnp.int32) % (Hh * Wh)
    yo, xo = p // Wh, p % Wh
    rows = []
    for q, s in qs_list:
        m = (yo + q >= 0) & (yo + q < Hh) & (xo + s >= 0) & (xo + s < Wh)
        rows.append(m.astype(jnp.float32))
    return jnp.stack(rows, axis=0)


# ---------------------------------------------------------------------------
# Fused kernel: conv (+ folded BN + bias) at the 4 pool offsets as ONE matmul,
# window max, LeakyReLU, lane-dense store.  Everything stays in registers.
# ---------------------------------------------------------------------------
def _make_fused_kernel(taps, qs_list, Wh, L):
    qs_index = {qs: i for i, qs in enumerate(qs_list)}

    def kernel(x_ref, w_ref, m_ref, o_ref):
        # Four space-to-depth parity slabs, each (Cin, L); loaded once.
        xs = [x_ref[0, pp, :, :] for pp in range(4)]
        ones_row = jnp.ones((1, L), jnp.float32)

        cols = []
        for per_pp in taps:                               # pool offsets (py, px)
            rows = []
            for ry, rx, q, s in per_pp:                   # conv taps (dy, dx)
                v = xs[ry * 2 + rx]
                shift = q * Wh + s
                if shift != 0:
                    v = pltpu.roll(v, (-shift) % L, 1)    # XLU lane rotate
                if (q, s) != (0, 0):
                    v = v * m_ref[qs_index[(q, s)], :]    # zero out-of-image taps
                rows.append(v)
            rows.append(ones_row)                         # folded conv+BN bias
            cols.append(jnp.concatenate(rows, axis=0))    # (K, L)
        patch = jnp.concatenate(cols, axis=1)             # (K, 4*L), 128-lane blocks

        # Conv + BN + bias for all four pool offsets in one MXU matmul.
        y = jnp.dot(w_ref[...], patch,
                    preferred_element_type=jnp.float32,
                    precision=jax.lax.Precision.HIGHEST)  # (Cout, 4*L)

        # 2x2/stride-2 maxpool = max over the four 128-lane slices; LeakyReLU
        # is monotone, so apply it once after the max.
        m = jnp.maximum(jnp.maximum(y[:, 0 * L:1 * L], y[:, 1 * L:2 * L]),
                        jnp.maximum(y[:, 2 * L:3 * L], y[:, 3 * L:4 * L]))
        m = jnp.maximum(m, 0.1 * m)                       # LeakyReLU(0.1)
        o_ref[0] = m.astype(o_ref.dtype)                  # (Cout, L) unmasked store

    return kernel


def conv_block1_forward(x_nchw, wmat, *, ks, block_batch=None):
    """x_nchw: (N, Cin, H, W) f32 -> (N, Cout, H//2, W//2) f32."""
    N, Cin, H, W = x_nchw.shape
    Cout, K = wmat.shape
    assert ks % 2 == 1, "only odd kernel sizes ('same' padding) supported"
    assert K == ks * ks * Cin + 1, "wmat must include the folded bias column"
    assert H % 2 == 0 and W % 2 == 0, "maxpool(2,2) requires even H and W"

    Hh, Wh = H // 2, W // 2
    HWp = Hh * Wh
    if block_batch is None:
        # Smallest Bt giving a >=128-lane output slab (unmasked stores).
        block_batch = max(1, min(N, -(-128 // HWp)))
        while N % block_batch:
            block_batch -= 1
    Bt = block_batch
    assert N % Bt == 0
    G = N // Bt
    L = Bt * HWp

    taps, qs_list = _tap_layout(ks)
    masks = _build_masks(Hh, Wh, Bt, qs_list)
    nm = masks.shape[0]

    # Wrapper-side layout plumbing (XLA): space-to-depth + batch blocking.
    # x_s2d[g, py*2+px, c, b*HWp + yo*Wh + xo] = x[g*Bt+b, c, 2*yo+py, 2*xo+px]
    x_s2d = (x_nchw.astype(jnp.float32)
             .reshape(G, Bt, Cin, Hh, 2, Wh, 2)
             .transpose(0, 4, 6, 2, 1, 3, 5)
             .reshape(G, 4, Cin, L))

    kernel = _make_fused_kernel(taps, qs_list, Wh, L)

    out_flat = pl.pallas_call(
        kernel,
        out_shape=jax.ShapeDtypeStruct((G, Cout, L), jnp.float32),
        grid=(G,),
        in_specs=[
            pl.BlockSpec((1, 4, Cin, L), lambda g: (g, 0, 0, 0)),
            pl.BlockSpec((Cout, K), lambda g: (0, 0)),
            pl.BlockSpec((nm, L), lambda g: (0, 0)),
        ],
        out_specs=pl.BlockSpec((1, Cout, L), lambda g: (g, 0, 0)),
        compiler_params=pltpu.CompilerParams(
            dimension_semantics=("parallel",)),   # N//Bt >= 2 -> v7x TCs split batch
    )(x_s2d, wmat, masks)

    # De-block the output back to NCHW (layout plumbing).
    return (out_flat.reshape(G, Cout, Bt, Hh, Wh)
            .transpose(0, 2, 1, 3, 4)
            .reshape(N, Cout, Hh, Wh))


# ---------------------------------------------------------------------------
# Parameter construction (deterministic) + BN folding (inference mode).
# NOTE: wmat column order is (dy, dx, ci) then bias -- it is coupled to the
# tap order produced by _tap_layout / _make_fused_kernel.
# ---------------------------------------------------------------------------
def fold_bn_into_conv(w_oihw, b, gamma, beta, mean, var, eps=1e-5):
    scale = gamma / jnp.sqrt(var + eps)                       # (Cout,)
    w_f = w_oihw * scale[:, None, None, None]
    b_f = (b - mean) * scale + beta
    Cout, Cin, kh, kw = w_oihw.shape
    wmat = jnp.transpose(w_f, (0, 2, 3, 1)).reshape(Cout, kh * kw * Cin)
    return jnp.concatenate([wmat, b_f[:, None]], axis=1)      # bias as last column


def make_params(key, cin, cout, ks):
    k = jax.random.split(key, 6)
    w = jax.random.normal(k[0], (cout, cin, ks, ks), jnp.float32) / ((ks * ks * cin) ** 0.5)
    b = 0.1 * jax.random.normal(k[1], (cout,), jnp.float32)
    gamma = 1.0 + 0.1 * jax.random.normal(k[2], (cout,), jnp.float32)
    beta = 0.1 * jax.random.normal(k[3], (cout,), jnp.float32)
    mean = 0.1 * jax.random.normal(k[4], (cout,), jnp.float32)
    var = jnp.abs(1.0 + 0.1 * jax.random.normal(k[5], (cout,), jnp.float32))
    return w, b, gamma, beta, mean, var


# ---------------------------------------------------------------------------
# Pure-JAX reference (same math as the PyTorch module in eval mode).
# ---------------------------------------------------------------------------
def reference_forward(x, w, b, gamma, beta, mean, var, eps=1e-5):
    y = lax.conv_general_dilated(
        x, w, window_strides=(1, 1), padding="SAME",
        dimension_numbers=("NCHW", "OIHW", "NCHW"),
        precision=lax.Precision.HIGHEST)
    y = y + b[None, :, None, None]
    scale = gamma / jnp.sqrt(var + eps)
    y = (y - mean[None, :, None, None]) * scale[None, :, None, None] + beta[None, :, None, None]
    y = jnp.where(y >= 0, y, 0.1 * y)
    y = lax.reduce_window(y, -jnp.inf, lax.max, (1, 1, 2, 2), (1, 1, 2, 2), "VALID")
    return y


if __name__ == "__main__":
    # Small config consistent with the module: conf.in_ch/out_ch/ks, strd=1.
    N, IN_CH, OUT_CH, H, W, KS = 2, 4, 8, 16, 16, 3

    key = jax.random.PRNGKey(0)
    k_x, k_p = jax.random.split(key)
    x = jax.random.normal(k_x, (N, IN_CH, H, W), jnp.float32)   # NCHW like PyTorch
    w, b, gamma, beta, mean, var = make_params(k_p, IN_CH, OUT_CH, KS)

    wmat = fold_bn_into_conv(w, b, gamma, beta, mean, var)

    out = conv_block1_forward(x, wmat, ks=KS)
    out = jax.block_until_ready(out)
    assert out.shape == (N, OUT_CH, H // 2, W // 2), out.shape

    ref = jax.block_until_ready(reference_forward(x, w, b, gamma, beta, mean, var))
    err = float(jnp.max(jnp.abs(out - ref)))
    assert err < 1e-3, f"max abs error vs reference: {err}"
    print("KERNEL_OK")
</pallas_src>

<mosaic_0001>
module attributes {stable_mosaic.version = 11 : i64} {
  func.func @kernel(%arg0: i32, %arg1: memref<1x4x4x128xf32, #tpu.memory_space<vmem>>, %arg2: memref<8x37xf32, #tpu.memory_space<vmem>>, %arg3: memref<8x128xf32, #tpu.memory_space<vmem>>, %arg4: memref<1x8x128xf32, #tpu.memory_space<vmem>>) attributes {dimension_semantics = [#tpu.dimension_semantics<parallel>], iteration_bounds = array<i64: 1>, scalar_prefetch = 0 : i64, scratch_operands = 0 : i64, tpu.core_type = #tpu.core_type<tc>, window_params = [{transform_indices = @transform_0, window_bounds = array<i64: 1, 4, 4, 128>}, {pipeline_mode = #tpu.pipeline_mode<synchronous>, transform_indices = @transform_1, window_bounds = array<i64: 8, 37>}, {pipeline_mode = #tpu.pipeline_mode<synchronous>, transform_indices = @transform_2, window_bounds = array<i64: 8, 128>}, {transform_indices = @transform_3, window_bounds = array<i64: 1, 8, 128>}]} {
    %c0 = arith.constant 0 : index
    %c0_0 = arith.constant 0 : index
    %c0_1 = arith.constant 0 : index
    %c0_2 = arith.constant 0 : index
    %0 = vector.load %arg1[%c0, %c0_0, %c0_1, %c0_2] : memref<1x4x4x128xf32, #tpu.memory_space<vmem>>, vector<1x1x4x128xf32>
    %1 = vector.shape_cast %0 : vector<1x1x4x128xf32> to vector<4x128xf32>
    %c0_3 = arith.constant 0 : index
    %c1 = arith.constant 1 : index
    %c0_4 = arith.constant 0 : index
    %c0_5 = arith.constant 0 : index
    %2 = vector.load %arg1[%c0_3, %c1, %c0_4, %c0_5] : memref<1x4x4x128xf32, #tpu.memory_space<vmem>>, vector<1x1x4x128xf32>
    %3 = vector.shape_cast %2 : vector<1x1x4x128xf32> to vector<4x128xf32>
    %c0_6 = arith.constant 0 : index
    %c2 = arith.constant 2 : index
    %c0_7 = arith.constant 0 : index
    %c0_8 = arith.constant 0 : index
    %4 = vector.load %arg1[%c0_6, %c2, %c0_7, %c0_8] : memref<1x4x4x128xf32, #tpu.memory_space<vmem>>, vector<1x1x4x128xf32>
    %5 = vector.shape_cast %4 : vector<1x1x4x128xf32> to vector<4x128xf32>
    %c0_9 = arith.constant 0 : index
    %c3 = arith.constant 3 : index
    %c0_10 = arith.constant 0 : index
    %c0_11 = arith.constant 0 : index
    %6 = vector.load %arg1[%c0_9, %c3, %c0_10, %c0_11] : memref<1x4x4x128xf32, #tpu.memory_space<vmem>>, vector<1x1x4x128xf32>
    %7 = vector.shape_cast %6 : vector<1x1x4x128xf32> to vector<4x128xf32>
    %cst = arith.constant 1.000000e+00 : f32
    %8 = vector.broadcast %cst : f32 to vector<1x128xf32>
    %c9_i32 = arith.constant 9 : i32
    %9 = tpu.dynamic_rotate %7 by %c9_i32 dim 1 : vector<4x128xf32>, i32 -> vector<4x128xf32>
    %c0_12 = arith.constant 0 : index
    %c0_13 = arith.constant 0 : index
    %10 = vector.load %arg3[%c0_12, %c0_13] : memref<8x128xf32, #tpu.memory_space<vmem>>, vector<1x128xf32>
    %11 = vector.shape_cast %10 : vector<1x128xf32> to vector<128xf32>
    %12 = vector.shape_cast %11 : vector<128xf32> to vector<1x128xf32>
    %13 = vector.broadcast %12 : vector<1x128xf32> to vector<4x128xf32>
    %14 = arith.mulf %9, %13 : vector<4x128xf32>
    %c8_i32 = arith.constant 8 : i32
    %15 = tpu.dynamic_rotate %5 by %c8_i32 dim 1 : vector<4x128xf32>, i32 -> vector<4x128xf32>
    %c1_14 = arith.constant 1 : index
    %c0_15 = arith.constant 0 : index
    %16 = vector.load %arg3[%c1_14, %c0_15] : memref<8x128xf32, #tpu.memory_space<vmem>>, vector<1x128xf32>
    %17 = vector.shape_cast %16 : vector<1x128xf32> to vector<128xf32>
    %18 = vector.shape_cast %17 : vector<128xf32> to vector<1x128xf32>
    %19 = vector.broadcast %18 : vector<1x128xf32> to vector<4x128xf32>
    %20 = arith.mulf %15, %19 : vector<4x128xf32>
    %c8_i32_16 = arith.constant 8 : i32
    %21 = tpu.dynamic_rotate %7 by %c8_i32_16 dim 1 : vector<4x128xf32>, i32 -> vector<4x128xf32>
    %c1_17 = arith.constant 1 : index
    %c0_18 = arith.constant 0 : index
    %22 = vector.load %arg3[%c1_17, %c0_18] : memref<8x128xf32, #tpu.memory_space<vmem>>, vector<1x128xf32>
    %23 = vector.shape_cast %22 : vector<1x128xf32> to vector<128xf32>
    %24 = vector.shape_cast %23 : vector<128xf32> to vector<1x128xf32>
    %25 = vector.broadcast %24 : vector<1x128xf32> to vector<4x128xf32>
    %26 = arith.mulf %21, %25 : vector<4x128xf32>
    %c1_i32 = arith.constant 1 : i32
    %27 = tpu.dynamic_rotate %3 by %c1_i32 dim 1 : vector<4x128xf32>, i32 -> vector<4x128xf32>
    %c2_19 = arith.constant 2 : index
    %c0_20 = arith.constant 0 : index
    %28 = vector.load %arg3[%c2_19, %c0_20] : memref<8x128xf32, #tpu.memory_space<vmem>>, vector<1x128xf32>
    %29 = vector.shape_cast %28 : vector<1x128xf32> to vector<128xf32>
    %30 = vector.shape_cast %29 : vector<128xf32> to vector<1x128xf32>
    %31 = vector.broadcast %30 : vector<1x128xf32> to vector<4x128xf32>
    %32 = arith.mulf %27, %31 : vector<4x128xf32>
    %c1_i32_21 = arith.constant 1 : i32
    %33 = tpu.dynamic_rotate %7 by %c1_i32_21 dim 1 : vector<4x128xf32>, i32 -> vector<4x128xf32>
    %c2_22 = arith.constant 2 : index
    %c0_23 = arith.constant 0 : index
    %34 = vector.load %arg3[%c2_22, %c0_23] : memref<8x128xf32, #tpu.memory_space<vmem>>, vector<1x128xf32>
    %35 = vector.shape_cast %34 : vector<1x128xf32> to vector<128xf32>
    %36 = vector.shape_cast %35 : vector<128xf32> to vector<1x128xf32>
    %37 = vector.broadcast %36 : vector<1x128xf32> to vector<4x128xf32>
    %38 = arith.mulf %33, %37 : vector<4x128xf32>
    %39 = tpu.concatenate %14, %20, %26, %32, %1, %3, %38, %5, %7, %8 in 0 : vector<4x128xf32>, vector<4x128xf32>, vector<4x128xf32>, vector<4x128xf32>, vector<4x128xf32>, vector<4x128xf32>, vector<4x128xf32>, vector<4x128xf32>, vector<4x128xf32>, vector<1x128xf32> -> vector<37x128xf32>
    %c8_i32_24 = arith.constant 8 : i32
    %40 = tpu.dynamic_rotate %5 by %c8_i32_24 dim 1 : vector<4x128xf32>, i32 -> vector<4x128xf32>
    %c1_25 = arith.constant 1 : index
    %c0_26 = arith.constant 0 : index
    %41 = vector.load %arg3[%c1_25, %c0_26] : memref<8x128xf32, #tpu.memory_space<vmem>>, vector<1x128xf32>
    %42 = vector.shape_cast %41 : vector<1x128xf32> to vector<128xf32>
    %43 = vector.shape_cast %42 : vector<128xf32> to vector<1x128xf32>
    %44 = vector.broadcast %43 : vector<1x128xf32> to vector<4x128xf32>
    %45 = arith.mulf %40, %44 : vector<4x128xf32>
    %c8_i32_27 = arith.constant 8 : i32
    %46 = tpu.dynamic_rotate %7 by %c8_i32_27 dim 1 : vector<4x128xf32>, i32 -> vector<4x128xf32>
    %c1_28 = arith.constant 1 : index
    %c0_29 = arith.constant 0 : index
    %47 = vector.load %arg3[%c1_28, %c0_29] : memref<8x128xf32, #tpu.memory_space<vmem>>, vector<1x128xf32>
    %48 = vector.shape_cast %47 : vector<1x128xf32> to vector<128xf32>
    %49 = vector.shape_cast %48 : vector<128xf32> to vector<1x128xf32>
    %50 = vector.broadcast %49 : vector<1x128xf32> to vector<4x128xf32>
    %51 = arith.mulf %46, %50 : vector<4x128xf32>
    %c7_i32 = arith.constant 7 : i32
    %52 = tpu.dynamic_rotate %5 by %c7_i32 dim 1 : vector<4x128xf32>, i32 -> vector<4x128xf32>
    %c3_30 = arith.constant 3 : index
    %c0_31 = arith.constant 0 : index
    %53 = vector.load %arg3[%c3_30, %c0_31] : memref<8x128xf32, #tpu.memory_space<vmem>>, vector<1x128xf32>
    %54 = vector.shape_cast %53 : vector<1x128xf32> to vector<128xf32>
    %55 = vector.shape_cast %54 : vector<128xf32> to vector<1x128xf32>
    %56 = vector.broadcast %55 : vector<1x128xf32> to vector<4x128xf32>
    %57 = arith.mulf %52, %56 : vector<4x128xf32>
    %c127_i32 = arith.constant 127 : i32
    %58 = tpu.dynamic_rotate %1 by %c127_i32 dim 1 : vector<4x128xf32>, i32 -> vector<4x128xf32>
    %c4 = arith.constant 4 : index
    %c0_32 = arith.constant 0 : index
    %59 = vector.load %arg3[%c4, %c0_32] : memref<8x128xf32, #tpu.memory_space<vmem>>, vector<1x128xf32>
    %60 = vector.shape_cast %59 : vector<1x128xf32> to vector<128xf32>
    %61 = vector.shape_cast %60 : vector<128xf32> to vector<1x128xf32>
    %62 = vector.broadcast %61 : vector<1x128xf32> to vector<4x128xf32>
    %63 = arith.mulf %58, %62 : vector<4x128xf32>
    %c127_i32_33 = arith.constant 127 : i32
    %64 = tpu.dynamic_rotate %5 by %c127_i32_33 dim 1 : vector<4x128xf32>, i32 -> vector<4x128xf32>
    %c4_34 = arith.constant 4 : index
    %c0_35 = arith.constant 0 : index
    %65 = vector.load %arg3[%c4_34, %c0_35] : memref<8x128xf32, #tpu.memory_space<vmem>>, vector<1x128xf32>
    %66 = vector.shape_cast %65 : vector<1x128xf32> to vector<128xf32>
    %67 = vector.shape_cast %66 : vector<128xf32> to vector<1x128xf32>
    %68 = vector.broadcast %67 : vector<1x128xf32> to vector<4x128xf32>
    %69 = arith.mulf %64, %68 : vector<4x128xf32>
    %70 = tpu.concatenate %45, %51, %57, %1, %3, %63, %5, %7, %69, %8 in 0 : vector<4x128xf32>, vector<4x128xf32>, vector<4x128xf32>, vector<4x128xf32>, vector<4x128xf32>, vector<4x128xf32>, vector<4x128xf32>, vector<4x128xf32>, vector<4x128xf32>, vector<1x128xf32> -> vector<37x128xf32>
    %c1_i32_36 = arith.constant 1 : i32
    %71 = tpu.dynamic_rotate %3 by %c1_i32_36 dim 1 : vector<4x128xf32>, i32 -> vector<4x128xf32>
    %c2_37 = arith.constant 2 : index
    %c0_38 = arith.constant 0 : index
    %72 = vector.load %arg3[%c2_37, %c0_38] : memref<8x128xf32, #tpu.memory_space<vmem>>, vector<1x128xf32>
    %73 = vector.shape_cast %72 : vector<1x128xf32> to vector<128xf32>
    %74 = vector.shape_cast %73 : vector<128xf32> to vector<1x128xf32>
    %75 = vector.broadcast %74 : vector<1x128xf32> to vector<4x128xf32>
    %76 = arith.mulf %71, %75 : vector<4x128xf32>
    %c1_i32_39 = arith.constant 1 : i32
    %77 = tpu.dynamic_rotate %7 by %c1_i32_39 dim 1 : vector<4x128xf32>, i32 -> vector<4x128xf32>
    %c2_40 = arith.constant 2 : index
    %c0_41 = arith.constant 0 : index
    %78 = vector.load %arg3[%c2_40, %c0_41] : memref<8x128xf32, #tpu.memory_space<vmem>>, vector<1x128xf32>
    %79 = vector.shape_cast %78 : vector<1x128xf32> to vector<128xf32>
    %80 = vector.shape_cast %79 : vector<128xf32> to vector<1x128xf32>
    %81 = vector.broadcast %80 : vector<1x128xf32> to vector<4x128xf32>
    %82 = arith.mulf %77, %81 : vector<4x128xf32>
    %c121_i32 = arith.constant 121 : i32
    %83 = tpu.dynamic_rotate %3 by %c121_i32 dim 1 : vector<4x128xf32>, i32 -> vector<4x128xf32>
    %c5 = arith.constant 5 : index
    %c0_42 = arith.constant 0 : index
    %84 = vector.load %arg3[%c5, %c0_42] : memref<8x128xf32, #tpu.memory_space<vmem>>, vector<1x128xf32>
    %85 = vector.shape_cast %84 : vector<1x128xf32> to vector<128xf32>
    %86 = vector.shape_cast %85 : vector<128xf32> to vector<1x128xf32>
    %87 = vector.broadcast %86 : vector<1x128xf32> to vector<4x128xf32>
    %88 = arith.mulf %83, %87 : vector<4x128xf32>
    %c120_i32 = arith.constant 120 : i32
    %89 = tpu.dynamic_rotate %1 by %c120_i32 dim 1 : vector<4x128xf32>, i32 -> vector<4x128xf32>
    %c6 = arith.constant 6 : index
    %c0_43 = arith.constant 0 : index
    %90 = vector.load %arg3[%c6, %c0_43] : memref<8x128xf32, #tpu.memory_space<vmem>>, vector<1x128xf32>
    %91 = vector.shape_cast %90 : vector<1x128xf32> to vector<128xf32>
    %92 = vector.shape_cast %91 : vector<128xf32> to vector<1x128xf32>
    %93 = vector.broadcast %92 : vector<1x128xf32> to vector<4x128xf32>
    %94 = arith.mulf %89, %93 : vector<4x128xf32>
    %c120_i32_44 = arith.constant 120 : i32
    %95 = tpu.dynamic_rotate %3 by %c120_i32_44 dim 1 : vector<4x128xf32>, i32 -> vector<4x128xf32>
    %c6_45 = arith.constant 6 : index
    %c0_46 = arith.constant 0 : index
    %96 = vector.load %arg3[%c6_45, %c0_46] : memref<8x128xf32, #tpu.memory_space<vmem>>, vector<1x128xf32>
    %97 = vector.shape_cast %96 : vector<1x128xf32> to vector<128xf32>
    %98 = vector.shape_cast %97 : vector<128xf32> to vector<1x128xf32>
    %99 = vector.broadcast %98 : vector<1x128xf32> to vector<4x128xf32>
    %100 = arith.mulf %95, %99 : vector<4x128xf32>
    %101 = tpu.concatenate %76, %1, %3, %82, %5, %7, %88, %94, %100, %8 in 0 : vector<4x128xf32>, vector<4x128xf32>, vector<4x128xf32>, vector<4x128xf32>, vector<4x128xf32>, vector<4x128xf32>, vector<4x128xf32>, vector<4x128xf32>, vector<4x128xf32>, vector<1x128xf32> -> vector<37x128xf32>
    %c127_i32_47 = arith.constant 127 : i32
    %102 = tpu.dynamic_rotate %1 by %c127_i32_47 dim 1 : vector<4x128xf32>, i32 -> vector<4x128xf32>
    %c4_48 = arith.constant 4 : index
    %c0_49 = arith.constant 0 : index
    %103 = vector.load %arg3[%c4_48, %c0_49] : memref<8x128xf32, #tpu.memory_space<vmem>>, vector<1x128xf32>
    %104 = vector.shape_cast %103 : vector<1x128xf32> to vector<128xf32>
    %105 = vector.shape_cast %104 : vector<128xf32> to vector<1x128xf32>
    %106 = vector.broadcast %105 : vector<1x128xf32> to vector<4x128xf32>
    %107 = arith.mulf %102, %106 : vector<4x128xf32>
    %c127_i32_50 = arith.constant 127 : i32
    %108 = tpu.dynamic_rotate %5 by %c127_i32_50 dim 1 : vector<4x128xf32>, i32 -> vector<4x128xf32>
    %c4_51 = arith.constant 4 : index
    %c0_52 = arith.constant 0 : index
    %109 = vector.load %arg3[%c4_51, %c0_52] : memref<8x128xf32, #tpu.memory_space<vmem>>, vector<1x128xf32>
    %110 = vector.shape_cast %109 : vector<1x128xf32> to vector<128xf32>
    %111 = vector.shape_cast %110 : vector<128xf32> to vector<1x128xf32>
    %112 = vector.broadcast %111 : vector<1x128xf32> to vector<4x128xf32>
    %113 = arith.mulf %108, %112 : vector<4x128xf32>
    %c120_i32_53 = arith.constant 120 : i32
    %114 = tpu.dynamic_rotate %1 by %c120_i32_53 dim 1 : vector<4x128xf32>, i32 -> vector<4x128xf32>
    %c6_54 = arith.constant 6 : index
    %c0_55 = arith.constant 0 : index
    %115 = vector.load %arg3[%c6_54, %c0_55] : memref<8x128xf32, #tpu.memory_space<vmem>>, vector<1x128xf32>
    %116 = vector.shape_cast %115 : vector<1x128xf32> to vector<128xf32>
    %117 = vector.shape_cast %116 : vector<128xf32> to vector<1x128xf32>
    %118 = vector.broadcast %117 : vector<1x128xf32> to vector<4x128xf32>
    %119 = arith.mulf %114, %118 : vector<4x128xf32>
    %c120_i32_56 = arith.constant 120 : i32
    %120 = tpu.dynamic_rotate %3 by %c120_i32_56 dim 1 : vector<4x128xf32>, i32 -> vector<4x128xf32>
    %c6_57 = arith.constant 6 : index
    %c0_58 = arith.constant 0 : index
    %121 = vector.load %arg3[%c6_57, %c0_58] : memref<8x128xf32, #tpu.memory_space<vmem>>, vector<1x128xf32>
    %122 = vector.shape_cast %121 : vector<1x128xf32> to vector<128xf32>
    %123 = vector.shape_cast %122 : vector<128xf32> to vector<1x128xf32>
    %124 = vector.broadcast %123 : vector<1x128xf32> to vector<4x128xf32>
    %125 = arith.mulf %120, %124 : vector<4x128xf32>
    %c119_i32 = arith.constant 119 : i32
    %126 = tpu.dynamic_rotate %1 by %c119_i32 dim 1 : vector<4x128xf32>, i32 -> vector<4x128xf32>
    %c7 = arith.constant 7 : index
    %c0_59 = arith.constant 0 : index
    %127 = vector.load %arg3[%c7, %c0_59] : memref<8x128xf32, #tpu.memory_space<vmem>>, vector<1x128xf32>
    %128 = vector.shape_cast %127 : vector<1x128xf32> to vector<128xf32>
    %129 = vector.shape_cast %128 : vector<128xf32> to vector<1x128xf32>
    %130 = vector.broadcast %129 : vector<1x128xf32> to vector<4x128xf32>
    %131 = arith.mulf %126, %130 : vector<4x128xf32>
    %132 = tpu.concatenate %1, %3, %107, %5, %7, %113, %119, %125, %131, %8 in 0 : vector<4x128xf32>, vector<4x128xf32>, vector<4x128xf32>, vector<4x128xf32>, vector<4x128xf32>, vector<4x128xf32>, vector<4x128xf32>, vector<4x128xf32>, vector<4x128xf32>, vector<1x128xf32> -> vector<37x128xf32>
    %133 = tpu.concatenate %39, %70, %101, %132 in 1 : vector<37x128xf32>, vector<37x128xf32>, vector<37x128xf32>, vector<37x128xf32> -> vector<37x512xf32>
    %c0_60 = arith.constant 0 : index
    %c0_61 = arith.constant 0 : index
    %134 = vector.load %arg2[%c0_60, %c0_61] : memref<8x37xf32, #tpu.memory_space<vmem>>, vector<8x37xf32>
    %cst_62 = arith.constant dense<0.000000e+00> : vector<8x512xf32>
    %135 = tpu.matmul %134, %133, %cst_62 {dimension_numbers = #tpu.dot_dimension_numbers<[1], [0], [0], [1], [0, 0, 1, 1], [], []>, precision = #tpu.contract_precision<fp32>} : vector<8x37xf32>, vector<37x512xf32>, vector<8x512xf32> -> vector<8x512xf32>
    %136 = vector.extract_strided_slice %135 {offsets = [0, 0], sizes = [8, 128], strides = [1, 1]} : vector<8x512xf32> to vector<8x128xf32>
    %137 = vector.extract_strided_slice %135 {offsets = [0, 128], sizes = [8, 128], strides = [1, 1]} : vector<8x512xf32> to vector<8x128xf32>
    %138 = arith.maximumf %136, %137 : vector<8x128xf32>
    %139 = vector.extract_strided_slice %135 {offsets = [0, 256], sizes = [8, 128], strides = [1, 1]} : vector<8x512xf32> to vector<8x128xf32>
    %140 = vector.extract_strided_slice %135 {offsets = [0, 384], sizes = [8, 128], strides = [1, 1]} : vector<8x512xf32> to vector<8x128xf32>
    %141 = arith.maximumf %139, %140 : vector<8x128xf32>
    %142 = arith.maximumf %138, %141 : vector<8x128xf32>
    %cst_63 = arith.constant 1.000000e-01 : f32
    %143 = vector.broadcast %cst_63 : f32 to vector<8x128xf32>
    %144 = arith.mulf %143, %142 : vector<8x128xf32>
    %145 = arith.maximumf %142, %144 : vector<8x128xf32>
    %c0_64 = arith.constant 0 : index
    %c0_65 = arith.constant 0 : index
    %c0_66 = arith.constant 0 : index
    %146 = vector.load %arg4[%c0_64, %c0_65, %c0_66] : memref<1x8x128xf32, #tpu.memory_space<vmem>>, vector<1x8x128xf32>
    %147 = vector.shape_cast %146 : vector<1x8x128xf32> to vector<8x128xf32>
    %148 = vector.shape_cast %145 : vector<8x128xf32> to vector<1x8x128xf32>
    tpu.vector_store %arg4[%c0_64, %c0_65, %c0_66], %148 {strides = array<i32>} : memref<1x8x128xf32, #tpu.memory_space<vmem>>, vector<1x8x128xf32>,
    return
  }
  func.func @transform_0(%arg0: i32) -> (i32, i32, i32, i32) {
    %c0_i32 = arith.constant 0 : i32
    %c0_i32_0 = arith.constant 0 : i32
    %c0_i32_1 = arith.constant 0 : i32
    %c0_i32_2 = arith.constant 0 : i32
    return %arg0, %c0_i32, %c0_i32_0, %c0_i32_1 : i32, i32, i32, i32
  }
  func.func @transform_1(%arg0: i32) -> (i32, i32) {
    %c0_i32 = arith.constant 0 : i32
    %c0_i32_0 = arith.constant 0 : i32
    %c0_i32_1 = arith.constant 0 : i32
    return %c0_i32, %c0_i32_0 : i32, i32
  }
  func.func @transform_2(%arg0: i32) -> (i32, i32) {
    %c0_i32 = arith.constant 0 : i32
    %c0_i32_0 = arith.constant 0 : i32
    %c0_i32_1 = arith.constant 0 : i32
    return %c0_i32, %c0_i32_0 : i32, i32
  }
  func.func @transform_3(%arg0: i32) -> (i32, i32, i32) {
    %c0_i32 = arith.constant 0 : i32
    %c0_i32_0 = arith.constant 0 : i32
    %c0_i32_1 = arith.constant 0 : i32
    return %arg0, %c0_i32, %c0_i32_0 : i32, i32, i32
  }
}

</mosaic_0001>

<llo_original>
// kernel: tpu_custom_call.1
$region0: #{tpu_custom_call.1}
  #allocation0 [shape = 'u32[]', space=smem, size = 0x4, offset = 0x4, fixed_abs, tag = 'smem constant byte address 0x4 - core index']
  #allocation1 [shape = 'u32[144,128]{1,0:T(1,128)}', space=vmem, size = 0x12000, scoped, tag = 'internal scratch']
  %s0 = inlined_call_operand.hbm [shape: f32[1,4,4,128], index: 0, kind: input, shape index: {}]
  %s1 = inlined_call_operand.hbm [shape: f32[8,37], index: 1, kind: input, shape index: {}]
  %s2 = inlined_call_operand.hbm [shape: f32[8,128], index: 2, kind: input, shape index: {}]
  %s3 = inlined_call_operand.hbm [shape: f32[1,8,128], index: 3, kind: output, shape index: {}]
  %s4 = sld [smem:[#allocation0]]
  $region34: #{tpu_custom_call.1} parent=0
    _
  %s6 = ssub.s32 1, %s4
  %s7 = scalar_select 0, %s6, %s4
  $region1: #{tpu_custom_call.1} parent=0
    #allocation2 [shape = 'u8[8192]{0}', space=vmem, size = 0x2000, scoped, tag = 'input window, operand 0, single buffered']
    #allocation3 [shape = 's32[1]{0}', space=sflag, size = 0x4, scoped, tag = 'scoped memory for tpu_custom_call.1']
    #allocation4 [shape = 's32[1]{0}', space=sflag, size = 0x4, scoped, tag = 'scoped memory for tpu_custom_call.1']
    #allocation5 [shape = 'u8[4096]{0}', space=vmem, size = 0x1000, scoped, tag = 'input window, operand 1, single buffered']
    #allocation6 [shape = 's32[1]{0}', space=sflag, size = 0x4, scoped, tag = 'scoped memory for tpu_custom_call.1']
    #allocation7 [shape = 'u8[4096]{0}', space=vmem, size = 0x1000, scoped, tag = 'input window, operand 2, single buffered']
    #allocation8 [shape = 'u8[4096]{0}', space=vmem, size = 0x1000, scoped, tag = 'output window, operand 0, single buffered']
    %8 = vsyncpa [#allocation3], 0
    %9 = vsyncpa [#allocation6], 0
    %10 = vsyncpa [#allocation4], 0
    // Predicated region
    $region2: #{tpu_custom_call.1} parent=1 // pred_check
      _
    $region3: #{tpu_custom_call.1} parent=1 // pred_check_branch
      %12 = sbr.rel (0) target = $region5
    $region4: #{tpu_custom_call.1} parent=1 // pred_region
      %s14 = ssub.s32 256, 256
      %15 = vsyncadd [#allocation3], %s14
      %s16 = sshll.u32 [#allocation2], 4
      %s17 = int_to_ptr.vmem [resolvable:$true] %s16
      %22 = dma.hbm_to_vmem [thread:$0]  %s0, 256, %s17, [#allocation3], 64, 64, 4
    $region5: #{tpu_custom_call.1} parent=1 // pred_fallthru
      _
    // Predicated region
    $region6: #{tpu_custom_call.1} parent=1 // pred_check
      _
    $region7: #{tpu_custom_call.1} parent=1 // pred_check_branch
      %24 = sbr.rel (0) target = $region9
    $region8: #{tpu_custom_call.1} parent=1 // pred_region
      %s26 = ssub.s32 128, 128
      %27 = vsyncadd [#allocation6], %s26
      %s29 = sshll.u32 [#allocation5], 4
      %s30 = int_to_ptr.vmem [resolvable:$true] %s29
      %32 = dma.hbm_to_vmem [thread:$0]  %s1, 128, %s30, [#allocation6]
    $region9: #{tpu_custom_call.1} parent=1 // pred_fallthru
      _
    // Predicated region
    $region10: #{tpu_custom_call.1} parent=1 // pred_check
      _
    $region11: #{tpu_custom_call.1} parent=1 // pred_check_branch
      %34 = sbr.rel (0) target = $region13
    $region12: #{tpu_custom_call.1} parent=1 // pred_region
      %s36 = ssub.s32 128, 128
      %37 = vsyncadd [#allocation6], %s36
      %s39 = sshll.u32 [#allocation7], 4
      %s40 = int_to_ptr.vmem [resolvable:$true] %s39
      %42 = dma.hbm_to_vmem [thread:$0]  %s2, 128, %s40, [#allocation6]
    $region13: #{tpu_custom_call.1} parent=1 // pred_fallthru
      _
    // Predicated region
    $region14: #{tpu_custom_call.1} parent=1 // pred_check
      _
    $region15: #{tpu_custom_call.1} parent=1 // pred_check_branch
      %44 = sbr.rel (0) target = $region17
    $region16: #{tpu_custom_call.1} parent=1 // pred_region
      %45 = dma.done [#allocation3], 256
    $region17: #{tpu_custom_call.1} parent=1 // pred_fallthru
      _
    // Predicated region
    $region18: #{tpu_custom_call.1} parent=1 // pred_check
      _
    $region19: #{tpu_custom_call.1} parent=1 // pred_check_branch
      %47 = sbr.rel (0) target = $region21
    $region20: #{tpu_custom_call.1} parent=1 // pred_region
      %48 = dma.done [#allocation6], 128
    $region21: #{tpu_custom_call.1} parent=1 // pred_fallthru
      _
    // Predicated region
    $region22: #{tpu_custom_call.1} parent=1 // pred_check
      _
    $region23: #{tpu_custom_call.1} parent=1 // pred_check_branch
      %50 = sbr.rel (0) target = $region25
    $region24: #{tpu_custom_call.1} parent=1 // pred_region
      %51 = dma.done [#allocation6], 128
    $region25: #{tpu_custom_call.1} parent=1 // pred_fallthru
      _
    %v52 = vld [vmem:[#allocation2] sm:$0xf]
    %s53 = scalar_lea.vmem [#allocation2], 4
    %v54 = vld [vmem:[%s53] sm:$0xf]
    %s55 = scalar_lea.vmem [#allocation2], 8
    %v56 = vld [vmem:[%s55] sm:$0xf]
    %s57 = scalar_lea.vmem [#allocation2], 12
    %v58 = vld [vmem:[%s57] sm:$0xf]
    %59 = vrot.lane.b32.xlu0 %v58, 9
    %v60 = vpop.permute.xlu0 %59
    %v61 = vld [vmem:[#allocation7] sm:$0x1]
    %v62 = vlaneseq
    %v63 = vshrl.u32 %v62, 7
    %v64 = vsub.s32 0, %v63
    %v65 = vrot.slane %v61, %v64
    %v66 = vmul.f32 %v60, %v65
    %67 = vrot.lane.b32.xlu0 %v56, 8
    %v68 = vpop.permute.xlu0 %67
    %v69 = vld [vmem:[#allocation7 + $0x1] sm:$0x1]
    %v70 = vlaneseq
    %v71 = vshrl.u32 %v70, 7
    %v72 = vsub.s32 0, %v71
    %v73 = vrot.slane %v69, %v72
    %v74 = vmul.f32 %v68, %v73
    %75 = vrot.lane.b32.xlu0 %v58, 8
    %v76 = vpop.permute.xlu0 %75
    %v77 = vmul.f32 %v76, %v73
    %78 = vrot.lane.b32.xlu0 %v54, 1
    %v79 = vpop.permute.xlu0 %78
    %v80 = vld [vmem:[#allocation7 + $0x2] sm:$0x1]
    %v81 = vlaneseq
    %v82 = vshrl.u32 %v81, 7
    %v83 = vsub.s32 0, %v82
    %v84 = vrot.slane %v80, %v83
    %v85 = vmul.f32 %v79, %v84
    %86 = vrot.lane.b32.xlu0 %v58, 1
    %v87 = vpop.permute.xlu0 %86
    %v88 = vmul.f32 %v87, %v84
    %v90 = vrot.slane %v74, 4
    %v93 = vrot.slane %v85, 4
    %v96 = vrot.slane %v54, 4
    %v99 = vrot.slane %v56, 4
    %vm101 = vcmask 1043456
    %v102 = vsel %vm101, %v66, %v90
    %v103 = vsel %vm101, %v77, %v93
    %v104 = vsel %vm101, %v52, %v96
    %v105 = vsel %vm101, %v88, %v99
    %v106 = vsel %vm101, %v58, 1.0
    %107 = vrot.lane.b32.xlu0 %v56, 7
    %v108 = vpop.permute.xlu0 %107
    %v109 = vld [vmem:[#allocation7 + $0x3] sm:$0x1]
    %v110 = vlaneseq
    %v111 = vshrl.u32 %v110, 7
    %v112 = vsub.s32 0, %v111
    %v113 = vrot.slane %v109, %v112
    %v114 = vmul.f32 %v108, %v113
    %115 = vrot.lane.b32.xlu0 %v52, 127
    %v116 = vpop.permute.xlu0 %115
    %v117 = vld [vmem:[#allocation7 + $0x4] sm:$0x1]
    %v118 = vlaneseq
    %v119 = vshrl.u32 %v118, 7
    %v120 = vsub.s32 0, %v119
    %v121 = vrot.slane %v117, %v120
    %v122 = vmul.f32 %v116, %v121
    %123 = vrot.lane.b32.xlu0 %v56, 127
    %v124 = vpop.permute.xlu0 %123
    %v125 = vmul.f32 %v124, %v121
    %v127 = vrot.slane %v77, 4
    %v130 = vrot.slane %v52, 4
    %v133 = vrot.slane %v122, 4
    %v136 = vrot.slane %v58, 4
    %v138 = vsel %vm101, %v74, %v127
    %v139 = vsel %vm101, %v114, %v130
    %v140 = vsel %vm101, %v54, %v133
    %v141 = vsel %vm101, %v56, %v136
    %v142 = vsel %vm101, %v125, 1.0
    %143 = vrot.lane.b32.xlu0 %v54, 121
    %v144 = vpop.permute.xlu0 %143
    %v145 = vld [vmem:[#allocation7 + $0x5] sm:$0x1]
    %v146 = vlaneseq
    %v147 = vshrl.u32 %v146, 7
    %v148 = vsub.s32 0, %v147
    %v149 = vrot.slane %v145, %v148
    %v150 = vmul.f32 %v144, %v149
    %151 = vrot.lane.b32.xlu0 %v52, 120
    %v152 = vpop.permute.xlu0 %151
    %v153 = vld [vmem:[#allocation7 + $0x6] sm:$0x1]
    %v154 = vlaneseq
    %v155 = vshrl.u32 %v154, 7
    %v156 = vsub.s32 0, %v155
    %v157 = vrot.slane %v153, %v156
    %v158 = vmul.f32 %v152, %v157
    %159 = vrot.lane.b32.xlu0 %v54, 120
    %v160 = vpop.permute.xlu0 %159
    %v161 = vmul.f32 %v160, %v157
    %v163 = vrot.slane %v88, 4
    %v166 = vrot.slane %v158, 4
    %v168 = vsel %vm101, %v85, %v130
    %v169 = vsel %vm101, %v54, %v163
    %v170 = vsel %vm101, %v150, %v166
    %v171 = vsel %vm101, %v161, 1.0
    %172 = vrot.lane.b32.xlu0 %v52, 119
    %v173 = vpop.permute.xlu0 %172
    %v174 = vld [vmem:[#allocation7 + $0x7] sm:$0x1]
    %v175 = vlaneseq
    %v176 = vshrl.u32 %v175, 7
    %v177 = vsub.s32 0, %v176
    %v178 = vrot.slane %v174, %v177
    %v179 = vmul.f32 %v173, %v178
    %v181 = vrot.slane %v125, 4
    %v184 = vrot.slane %v161, 4
    %v186 = vsel %vm101, %v122, %v99
    %v187 = vsel %vm101, %v58, %v181
    %v188 = vsel %vm101, %v158, %v184
    %v189 = vsel %vm101, %v179, 1.0
    %v190 = vld [vmem:[#allocation5] sm:$0xff]
    %vm191 = vcmask 302080
    %v193 = vsel %vm191, %v190, 0
    %vm195 = vcmask 1044480
    %v197 = vsel %vm195, %v106, 0
    %v200 = vsel %vm195, %v142, 0
    %v203 = vsel %vm195, %v171, 0
    %v206 = vsel %vm195, %v189, 0
    %208 = vmatprep.subr.mxu0 0.0
    %209 = vmatpush1.msra.mxu0 0.0
    %210 = vmatprep.subr.mxu0 0.0
    %211 = vmatpush1.msra.mxu0 0.0
    %212 = vmatprep.subr.mxu0 0.0
    %213 = vmatpush1.msra.mxu0 0.0
    %214 = vmatprep.subr.mxu0 0.0
    %215 = vmatpush1.msra.mxu0 0.0
    %216 = vmatprep.subr.mxu0 0.0
    %217 = vmatpush1.msra.mxu0 0.0
    %218 = vmatprep.subr.mxu0 0.0
    %219 = vmatpush1.msra.mxu0 0.0
    %220 = vmatprep.subr.mxu0 0.0
    %221 = vmatpush1.msra.mxu0 0.0
    %222 = vmatprep.subr.mxu0 0.0
    %223 = vmatpush1.msra.mxu0 0.0
    %224 = vmatprep.subr.mxu0 0.0
    %225 = vmatpush1.msra.mxu0 0.0
    %226 = vmatprep.subr.mxu0 0.0
    %227 = vmatpush1.msra.mxu0 0.0
    %228 = vmatprep.subr.mxu0 0.0
    %229 = vmatpush1.msra.mxu0 0.0
    %v230 = vand.u32 %v200, 4294901760
    %231 = vmatprep.subr.mxu0 %v230
    %v232 = vand.u32 %v197, 4294901760
    %233 = vmatpush1.msra.mxu0 %v232
    %v234 = vand.u32 %v141, 4294901760
    %235 = vmatprep.subr.mxu0 %v234
    %v236 = vand.u32 %v105, 4294901760
    %237 = vmatpush1.msra.mxu0 %v236
    %v238 = vand.u32 %v140, 4294901760
    %239 = vmatprep.subr.mxu0 %v238
    %v240 = vand.u32 %v104, 4294901760
    %241 = vmatpush1.msra.mxu0 %v240
    %v242 = vand.u32 %v139, 4294901760
    %243 = vmatprep.subr.mxu0 %v242
    %v244 = vand.u32 %v103, 4294901760
    %245 = vmatpush1.msra.mxu0 %v244
    %v246 = vand.u32 %v138, 4294901760
    %247 = vmatprep.subr.mxu0 %v246
    %v248 = vand.u32 %v102, 4294901760
    %249 = vmatpush1.msra.mxu0 %v248
    %250 = vmatprep.subr.mxu0 0.0
    %251 = vmatpush2.msra.mxu0 0.0
    %252 = vmatprep.subr.mxu0 0.0
    %253 = vmatpush2.msra.mxu0 0.0
    %254 = vmatprep.subr.mxu0 0.0
    %255 = vmatpush2.msra.mxu0 0.0
    %256 = vmatprep.subr.mxu0 0.0
    %257 = vmatpush2.msra.mxu0 0.0
    %258 = vmatprep.subr.mxu0 0.0
    %259 = vmatpush2.msra.mxu0 0.0
    %260 = vmatprep.subr.mxu0 0.0
    %261 = vmatpush2.msra.mxu0 0.0
    %262 = vmatprep.subr.mxu0 0.0
    %263 = vmatpush2.msra.mxu0 0.0
    %264 = vmatprep.subr.mxu0 0.0
    %265 = vmatpush2.msra.mxu0 0.0
    %266 = vmatprep.subr.mxu0 0.0
    %267 = vmatpush2.msra.mxu0 0.0
    %268 = vmatprep.subr.mxu0 0.0
    %269 = vmatpush2.msra.mxu0 0.0
    %270 = vmatprep.subr.mxu0 0.0
    %271 = vmatpush2.msra.mxu0 0.0
    %272 = vmatprep.subr.mxu0 0.0
    %273 = vmatpush2.msra.mxu0 0.0
    %274 = vmatprep.subr.mxu0 0.0
    %275 = vmatpush2.msra.mxu0 0.0
    %276 = vmatprep.subr.mxu0 0.0
    %277 = vmatpush2.msra.mxu0 0.0
    %278 = vmatprep.subr.mxu0 0.0
    %279 = vmatpush2.msra.mxu0 0.0
    %280 = vmatprep.subr.mxu0 0.0
    %281 = vmatpush2.msra.mxu0 0.0
    %282 = vmatprep.mubr.f32.mxu0 0.0
    %v283 = vand.u32 %v193, 4294901760
    %v284 = vsub.f32 %v193, %v283
    %v285 = vand.u32 %v284, 4294901760
    %v286 = vsub.f32 %v284, %v285
    %v287 = vand.u32 %v286, 4294901760
    %288 = vmatmul.mubr.f32.gmra.mxu0 %v287
    %v289 = vpop.f32.mrf.mxu0
    %v290 = vadd.f32 0.0, %v289
    %v291 = vpop.f32.mrf.mxu0
    %v292 = vadd.f32 0.0, %v291
    %293 = vdwg.mxu0
    %294 = vmatprep.subr.mxu0 0.0
    %295 = vmatpush1.msra.mxu0 0.0
    %296 = vmatprep.subr.mxu0 0.0
    %297 = vmatpush1.msra.mxu0 0.0
    %298 = vmatprep.subr.mxu0 0.0
    %299 = vmatpush1.msra.mxu0 0.0
    %300 = vmatprep.subr.mxu0 0.0
    %301 = vmatpush1.msra.mxu0 0.0
    %302 = vmatprep.subr.mxu0 0.0
    %303 = vmatpush1.msra.mxu0 0.0
    %304 = vmatprep.subr.mxu0 0.0
    %305 = vmatpush1.msra.mxu0 0.0
    %306 = vmatprep.subr.mxu0 0.0
    %307 = vmatpush1.msra.mxu0 0.0
    %308 = vmatprep.subr.mxu0 0.0
    %309 = vmatpush1.msra.mxu0 0.0
    %310 = vmatprep.subr.mxu0 0.0
    %311 = vmatpush1.msra.mxu0 0.0
    %312 = vmatprep.subr.mxu0 0.0
    %313 = vmatpush1.msra.mxu0 0.0
    %314 = vmatprep.subr.mxu0 0.0
    %315 = vmatpush1.msra.mxu0 0.0
    %v316 = vand.u32 %v200, 4294901760
    %v317 = vsub.f32 %v200, %v316
    %v318 = vand.u32 %v317, 4294901760
    %v319 = vsub.f32 %v317, %v318
    %v320 = vand.u32 %v319, 4294901760
    %321 = vmatprep.subr.mxu0 %v320
    %v322 = vand.u32 %v197, 4294901760
    %v323 = vsub.f32 %v197, %v322
    %v324 = vand.u32 %v323, 4294901760
    %v325 = vsub.f32 %v323, %v324
    %v326 = vand.u32 %v325, 4294901760
    %327 = vmatpush1.msra.mxu0 %v326
    %v328 = vand.u32 %v141, 4294901760
    %v329 = vsub.f32 %v141, %v328
    %v330 = vand.u32 %v329, 4294901760
    %v331 = vsub.f32 %v329, %v330
    %v332 = vand.u32 %v331, 4294901760
    %333 = vmatprep.subr.mxu0 %v332
    %v334 = vand.u32 %v105, 4294901760
    %v335 = vsub.f32 %v105, %v334
    %v336 = vand.u32 %v335, 4294901760
    %v337 = vsub.f32 %v335, %v336
    %v338 = vand.u32 %v337, 4294901760
    %339 = vmatpush1.msra.mxu0 %v338
    %v340 = vand.u32 %v140, 4294901760
    %v341 = vsub.f32 %v140, %v340
    %v342 = vand.u32 %v341, 4294901760
    %v343 = vsub.f32 %v341, %v342
    %v344 = vand.u32 %v343, 4294901760
    %345 = vmatprep.subr.mxu0 %v344
    %v346 = vand.u32 %v104, 4294901760
    %v347 = vsub.f32 %v104, %v346
    %v348 = vand.u32 %v347, 4294901760
    %v349 = vsub.f32 %v347, %v348
    %v350 = vand.u32 %v349, 4294901760
    %351 = vmatpush1.msra.mxu0 %v350
    %v352 = vand.u32 %v139, 4294901760
    %v353 = vsub.f32 %v139, %v352
    %v354 = vand.u32 %v353, 4294901760
    %v355 = vsub.f32 %v353, %v354
    %v356 = vand.u32 %v355, 4294901760
    %357 = vmatprep.subr.mxu0 %v356
    %v358 = vand.u32 %v103, 4294901760
    %v359 = vsub.f32 %v103, %v358
    %v360 = vand.u32 %v359, 4294901760
    %v361 = vsub.f32 %v359, %v360
    %v362 = vand.u32 %v361, 4294901760
    %363 = vmatpush1.msra.mxu0 %v362
    %v364 = vand.u32 %v138, 4294901760
    %v365 = vsub.f32 %v138, %v364
    %v366 = vand.u32 %v365, 4294901760
    %v367 = vsub.f32 %v365, %v366
    %v368 = vand.u32 %v367, 4294901760
    %369 = vmatprep.subr.mxu0 %v368
    %v370 = vand.u32 %v102, 4294901760
    %v371 = vsub.f32 %v102, %v370
    %v372 = vand.u32 %v371, 4294901760
    %v373 = vsub.f32 %v371, %v372
    %v374 = vand.u32 %v373, 4294901760
    %375 = vmatpush1.msra.mxu0 %v374
    %376 = vmatprep.subr.mxu0 0.0
    %377 = vmatpush2.msra.mxu0 0.0
    %378 = vmatprep.subr.mxu0 0.0
    %379 = vmatpush2.msra.mxu0 0.0
    %380 = vmatprep.subr.mxu0 0.0
    %381 = vmatpush2.msra.mxu0 0.0
    %382 = vmatprep.subr.mxu0 0.0
    %383 = vmatpush2.msra.mxu0 0.0
    %384 = vmatprep.subr.mxu0 0.0
    %385 = vmatpush2.msra.mxu0 0.0
    %386 = vmatprep.subr.mxu0 0.0
    %387 = vmatpush2.msra.mxu0 0.0
    %388 = vmatprep.subr.mxu0 0.0
    %389 = vmatpush2.msra.mxu0 0.0
    %390 = vmatprep.subr.mxu0 0.0
    %391 = vmatpush2.msra.mxu0 0.0
    %392 = vmatprep.subr.mxu0 0.0
    %393 = vmatpush2.msra.mxu0 0.0
    %394 = vmatprep.subr.mxu0 0.0
    %395 = vmatpush2.msra.mxu0 0.0
    %396 = vmatprep.subr.mxu0 0.0
    %397 = vmatpush2.msra.mxu0 0.0
    %398 = vmatprep.subr.mxu0 0.0
    %399 = vmatpush2.msra.mxu0 0.0
    %400 = vmatprep.subr.mxu0 0.0
    %401 = vmatpush2.msra.mxu0 0.0
    %402 = vmatprep.subr.mxu0 0.0
    %403 = vmatpush2.msra.mxu0 0.0
    %404 = vmatprep.subr.mxu0 0.0
    %405 = vmatpush2.msra.mxu0 0.0
    %406 = vmatprep.subr.mxu0 0.0
    %407 = vmatpush2.msra.mxu0 0.0
    %408 = vmatprep.mubr.f32.mxu0 0.0
    %v409 = vand.u32 %v193, 4294901760
    %410 = vmatmul.mubr.f32.gmra.mxu0 %v409
    %v411 = vpop.f32.mrf.mxu0
    %v412 = vadd.f32 %v290, %v411
    %v413 = vpop.f32.mrf.mxu0
    %v414 = vadd.f32 %v292, %v413
    %415 = vdwg.mxu0
    %416 = vmatprep.subr.mxu0 0.0
    %417 = vmatpush1.msra.mxu0 0.0
    %418 = vmatprep.subr.mxu0 0.0
    %419 = vmatpush1.msra.mxu0 0.0
    %420 = vmatprep.subr.mxu0 0.0
    %421 = vmatpush1.msra.mxu0 0.0
    %422 = vmatprep.subr.mxu0 0.0
    %423 = vmatpush1.msra.mxu0 0.0
    %424 = vmatprep.subr.mxu0 0.0
    %425 = vmatpush1.msra.mxu0 0.0
    %426 = vmatprep.subr.mxu0 0.0
    %427 = vmatpush1.msra.mxu0 0.0
    %428 = vmatprep.subr.mxu0 0.0
    %429 = vmatpush1.msra.mxu0 0.0
    %430 = vmatprep.subr.mxu0 0.0
    %431 = vmatpush1.msra.mxu0 0.0
    %432 = vmatprep.subr.mxu0 0.0
    %433 = vmatpush1.msra.mxu0 0.0
    %434 = vmatprep.subr.mxu0 0.0
    %435 = vmatpush1.msra.mxu0 0.0
    %436 = vmatprep.subr.mxu0 0.0
    %437 = vmatpush1.msra.mxu0 0.0
    %v438 = vand.u32 %v200, 4294901760
    %v439 = vsub.f32 %v200, %v438
    %440 = vmatprep.subr.mxu0 %v439
    %v441 = vand.u32 %v197, 4294901760
    %v442 = vsub.f32 %v197, %v441
    %443 = vmatpush1.msra.mxu0 %v442
    %v444 = vand.u32 %v141, 4294901760
    %v445 = vsub.f32 %v141, %v444
    %446 = vmatprep.subr.mxu0 %v445
    %v447 = vand.u32 %v105, 4294901760
    %v448 = vsub.f32 %v105, %v447
    %449 = vmatpush1.msra.mxu0 %v448
    %v450 = vand.u32 %v140, 4294901760
    %v451 = vsub.f32 %v140, %v450
    %452 = vmatprep.subr.mxu0 %v451
    %v453 = vand.u32 %v104, 4294901760
    %v454 = vsub.f32 %v104, %v453
    %455 = vmatpush1.msra.mxu0 %v454
    %v456 = vand.u32 %v139, 4294901760
    %v457 = vsub.f32 %v139, %v456
    %458 = vmatprep.subr.mxu0 %v457
    %v459 = vand.u32 %v103, 4294901760
    %v460 = vsub.f32 %v103, %v459
    %461 = vmatpush1.msra.mxu0 %v460
    %v462 = vand.u32 %v138, 4294901760
    %v463 = vsub.f32 %v138, %v462
    %464 = vmatprep.subr.mxu0 %v463
    %v465 = vand.u32 %v102, 4294901760
    %v466 = vsub.f32 %v102, %v465
    %467 = vmatpush1.msra.mxu0 %v466
    %468 = vmatprep.subr.mxu0 0.0
    %469 = vmatpush2.msra.mxu0 0.0
    %470 = vmatprep.subr.mxu0 0.0
    %471 = vmatpush2.msra.mxu0 0.0
    %472 = vmatprep.subr.mxu0 0.0
    %473 = vmatpush2.msra.mxu0 0.0
    %474 = vmatprep.subr.mxu0 0.0
    %475 = vmatpush2.msra.mxu0 0.0
    %476 = vmatprep.subr.mxu0 0.0
    %477 = vmatpush2.msra.mxu0 0.0
    %478 = vmatprep.subr.mxu0 0.0
    %479 = vmatpush2.msra.mxu0 0.0
    %480 = vmatprep.subr.mxu0 0.0
    %481 = vmatpush2.msra.mxu0 0.0
    %482 = vmatprep.subr.mxu0 0.0
    %483 = vmatpush2.msra.mxu0 0.0
    %484 = vmatprep.subr.mxu0 0.0
    %485 = vmatpush2.msra.mxu0 0.0
    %486 = vmatprep.subr.mxu0 0.0
    %487 = vmatpush2.msra.mxu0 0.0
    %488 = vmatprep.subr.mxu0 0.0
    %489 = vmatpush2.msra.mxu0 0.0
    %490 = vmatprep.subr.mxu0 0.0
    %491 = vmatpush2.msra.mxu0 0.0
    %492 = vmatprep.subr.mxu0 0.0
    %493 = vmatpush2.msra.mxu0 0.0
    %494 = vmatprep.subr.mxu0 0.0
    %495 = vmatpush2.msra.mxu0 0.0
    %496 = vmatprep.subr.mxu0 0.0
    %497 = vmatpush2.msra.mxu0 0.0
    %498 = vmatprep.subr.mxu0 0.0
    %499 = vmatpush2.msra.mxu0 0.0
    %500 = vmatprep.mubr.f32.mxu0 0.0
    %v501 = vand.u32 %v193, 4294901760
    %v502 = vsub.f32 %v193, %v501
    %503 = vmatmul.mubr.f32.gmra.mxu0 %v502
    %v504 = vpop.f32.mrf.mxu0
    %v505 = vadd.f32 %v412, %v504
    %v506 = vpop.f32.mrf.mxu0
    %v507 = vadd.f32 %v414, %v506
    %508 = vdwg.mxu0
    %509 = vmatprep.subr.mxu0 0.0
    %510 = vmatpush1.msra.mxu0 0.0
    %511 = vmatprep.subr.mxu0 0.0
    %512 = vmatpush1.msra.mxu0 0.0
    %513 = vmatprep.subr.mxu0 0.0
    %514 = vmatpush1.msra.mxu0 0.0
    %515 = vmatprep.subr.mxu0 0.0
    %516 = vmatpush1.msra.mxu0 0.0
    %517 = vmatprep.subr.mxu0 0.0
    %518 = vmatpush1.msra.mxu0 0.0
    %519 = vmatprep.subr.mxu0 0.0
    %520 = vmatpush1.msra.mxu0 0.0
    %521 = vmatprep.subr.mxu0 0.0
    %522 = vmatpush1.msra.mxu0 0.0
    %523 = vmatprep.subr.mxu0 0.0
    %524 = vmatpush1.msra.mxu0 0.0
    %525 = vmatprep.subr.mxu0 0.0
    %526 = vmatpush1.msra.mxu0 0.0
    %527 = vmatprep.subr.mxu0 0.0
    %528 = vmatpush1.msra.mxu0 0.0
    %529 = vmatprep.subr.mxu0 0.0
    %530 = vmatpush1.msra.mxu0 0.0
    %v531 = vand.u32 %v200, 4294901760
    %532 = vmatprep.subr.mxu0 %v531
    %v533 = vand.u32 %v197, 4294901760
    %534 = vmatpush1.msra.mxu0 %v533
    %v535 = vand.u32 %v141, 4294901760
    %536 = vmatprep.subr.mxu0 %v535
    %v537 = vand.u32 %v105, 4294901760
    %538 = vmatpush1.msra.mxu0 %v537
    %v539 = vand.u32 %v140, 4294901760
    %540 = vmatprep.subr.mxu0 %v539
    %v541 = vand.u32 %v104, 4294901760
    %542 = vmatpush1.msra.mxu0 %v541
    %v543 = vand.u32 %v139, 4294901760
    %544 = vmatprep.subr.mxu0 %v543
    %v545 = vand.u32 %v103, 4294901760
    %546 = vmatpush1.msra.mxu0 %v545
    %v547 = vand.u32 %v138, 4294901760
    %548 = vmatprep.subr.mxu0 %v547
    %v549 = vand.u32 %v102, 4294901760
    %550 = vmatpush1.msra.mxu0 %v549
    %551 = vmatprep.subr.mxu0 0.0
    %552 = vmatpush2.msra.mxu0 0.0
    %553 = vmatprep.subr.mxu0 0.0
    %554 = vmatpush2.msra.mxu0 0.0
    %555 = vmatprep.subr.mxu0 0.0
    %556 = vmatpush2.msra.mxu0 0.0
    %557 = vmatprep.subr.mxu0 0.0
    %558 = vmatpush2.msra.mxu0 0.0
    %559 = vmatprep.subr.mxu0 0.0
    %560 = vmatpush2.msra.mxu0 0.0
    %561 = vmatprep.subr.mxu0 0.0
    %562 = vmatpush2.msra.mxu0 0.0
    %563 = vmatprep.subr.mxu0 0.0
    %564 = vmatpush2.msra.mxu0 0.0
    %565 = vmatprep.subr.mxu0 0.0
    %566 = vmatpush2.msra.mxu0 0.0
    %567 = vmatprep.subr.mxu0 0.0
    %568 = vmatpush2.msra.mxu0 0.0
    %569 = vmatprep.subr.mxu0 0.0
    %570 = vmatpush2.msra.mxu0 0.0
    %571 = vmatprep.subr.mxu0 0.0
    %572 = vmatpush2.msra.mxu0 0.0
    %573 = vmatprep.subr.mxu0 0.0
    %574 = vmatpush2.msra.mxu0 0.0
    %575 = vmatprep.subr.mxu0 0.0
    %576 = vmatpush2.msra.mxu0 0.0
    %577 = vmatprep.subr.mxu0 0.0
    %578 = vmatpush2.msra.mxu0 0.0
    %579 = vmatprep.subr.mxu0 0.0
    %580 = vmatpush2.msra.mxu0 0.0
    %581 = vmatprep.subr.mxu0 0.0
    %582 = vmatpush2.msra.mxu0 0.0
    %583 = vmatprep.mubr.f32.mxu0 0.0
    %v584 = vand.u32 %v193, 4294901760
    %v585 = vsub.f32 %v193, %v584
    %v586 = vand.u32 %v585, 4294901760
    %587 = vmatmul.mubr.f32.gmra.mxu0 %v586
    %v588 = vpop.f32.mrf.mxu0
    %v589 = vadd.f32 %v505, %v588
    %v590 = vpop.f32.mrf.mxu0
    %v591 = vadd.f32 %v507, %v590
    %592 = vdwg.mxu0
    %593 = vmatprep.subr.mxu0 0.0
    %594 = vmatpush1.msra.mxu0 0.0
    %595 = vmatprep.subr.mxu0 0.0
    %596 = vmatpush1.msra.mxu0 0.0
    %597 = vmatprep.subr.mxu0 0.0
    %598 = vmatpush1.msra.mxu0 0.0
    %599 = vmatprep.subr.mxu0 0.0
    %600 = vmatpush1.msra.mxu0 0.0
    %601 = vmatprep.subr.mxu0 0.0
    %602 = vmatpush1.msra.mxu0 0.0
    %603 = vmatprep.subr.mxu0 0.0
    %604 = vmatpush1.msra.mxu0 0.0
    %605 = vmatprep.subr.mxu0 0.0
    %606 = vmatpush1.msra.mxu0 0.0
    %607 = vmatprep.subr.mxu0 0.0
    %608 = vmatpush1.msra.mxu0 0.0
    %609 = vmatprep.subr.mxu0 0.0
    %610 = vmatpush1.msra.mxu0 0.0
    %611 = vmatprep.subr.mxu0 0.0
    %612 = vmatpush1.msra.mxu0 0.0
    %613 = vmatprep.subr.mxu0 0.0
    %614 = vmatpush1.msra.mxu0 0.0
    %v615 = vand.u32 %v200, 4294901760
    %v616 = vsub.f32 %v200, %v615
    %v617 = vand.u32 %v616, 4294901760
    %618 = vmatprep.subr.mxu0 %v617
    %v619 = vand.u32 %v197, 4294901760
    %v620 = vsub.f32 %v197, %v619
    %v621 = vand.u32 %v620, 4294901760
    %622 = vmatpush1.msra.mxu0 %v621
    %v623 = vand.u32 %v141, 4294901760
    %v624 = vsub.f32 %v141, %v623
    %v625 = vand.u32 %v624, 4294901760
    %626 = vmatprep.subr.mxu0 %v625
    %v627 = vand.u32 %v105, 4294901760
    %v628 = vsub.f32 %v105, %v627
    %v629 = vand.u32 %v628, 4294901760
    %630 = vmatpush1.msra.mxu0 %v629
    %v631 = vand.u32 %v140, 4294901760
    %v632 = vsub.f32 %v140, %v631
    %v633 = vand.u32 %v632, 4294901760
    %634 = vmatprep.subr.mxu0 %v633
    %v635 = vand.u32 %v104, 4294901760
    %v636 = vsub.f32 %v104, %v635
    %v637 = vand.u32 %v636, 4294901760
    %638 = vmatpush1.msra.mxu0 %v637
    %v639 = vand.u32 %v139, 4294901760
    %v640 = vsub.f32 %v139, %v639
    %v641 = vand.u32 %v640, 4294901760
    %642 = vmatprep.subr.mxu0 %v641
    %v643 = vand.u32 %v103, 4294901760
    %v644 = vsub.f32 %v103, %v643
    %v645 = vand.u32 %v644, 4294901760
    %646 = vmatpush1.msra.mxu0 %v645
    %v647 = vand.u32 %v138, 4294901760
    %v648 = vsub.f32 %v138, %v647
    %v649 = vand.u32 %v648, 4294901760
    %650 = vmatprep.subr.mxu0 %v649
    %v651 = vand.u32 %v102, 4294901760
    %v652 = vsub.f32 %v102, %v651
    %v653 = vand.u32 %v652, 4294901760
    %654 = vmatpush1.msra.mxu0 %v653
    %655 = vmatprep.subr.mxu0 0.0
    %656 = vmatpush2.msra.mxu0 0.0
    %657 = vmatprep.subr.mxu0 0.0
    %658 = vmatpush2.msra.mxu0 0.0
    %659 = vmatprep.subr.mxu0 0.0
    %660 = vmatpush2.msra.mxu0 0.0
    %661 = vmatprep.subr.mxu0 0.0
    %662 = vmatpush2.msra.mxu0 0.0
    %663 = vmatprep.subr.mxu0 0.0
    %664 = vmatpush2.msra.mxu0 0.0
    %665 = vmatprep.subr.mxu0 0.0
    %666 = vmatpush2.msra.mxu0 0.0
    %667 = vmatprep.subr.mxu0 0.0
    %668 = vmatpush2.msra.mxu0 0.0
    %669 = vmatprep.subr.mxu0 0.0
    %670 = vmatpush2.msra.mxu0 0.0
    %671 = vmatprep.subr.mxu0 0.0
    %672 = vmatpush2.msra.mxu0 0.0
    %673 = vmatprep.subr.mxu0 0.0
    %674 = vmatpush2.msra.mxu0 0.0
    %675 = vmatprep.subr.mxu0 0.0
    %676 = vmatpush2.msra.mxu0 0.0
    %677 = vmatprep.subr.mxu0 0.0
    %678 = vmatpush2.msra.mxu0 0.0
    %679 = vmatprep.subr.mxu0 0.0
    %680 = vmatpush2.msra.mxu0 0.0
    %681 = vmatprep.subr.mxu0 0.0
    %682 = vmatpush2.msra.mxu0 0.0
    %683 = vmatprep.subr.mxu0 0.0
    %684 = vmatpush2.msra.mxu0 0.0
    %685 = vmatprep.subr.mxu0 0.0
    %686 = vmatpush2.msra.mxu0 0.0
    %687 = vmatprep.mubr.f32.mxu0 0.0
    %v688 = vand.u32 %v193, 4294901760
    %689 = vmatmul.mubr.f32.gmra.mxu0 %v688
    %v690 = vpop.f32.mrf.mxu0
    %v691 = vadd.f32 %v589, %v690
    %v692 = vpop.f32.mrf.mxu0
    %v693 = vadd.f32 %v591, %v692
    %694 = vdwg.mxu0
    %695 = vmatprep.subr.mxu0 0.0
    %696 = vmatpush1.msra.mxu0 0.0
    %697 = vmatprep.subr.mxu0 0.0
    %698 = vmatpush1.msra.mxu0 0.0
    %699 = vmatprep.subr.mxu0 0.0
    %700 = vmatpush1.msra.mxu0 0.0
    %701 = vmatprep.subr.mxu0 0.0
    %702 = vmatpush1.msra.mxu0 0.0
    %703 = vmatprep.subr.mxu0 0.0
    %704 = vmatpush1.msra.mxu0 0.0
    %705 = vmatprep.subr.mxu0 0.0
    %706 = vmatpush1.msra.mxu0 0.0
    %707 = vmatprep.subr.mxu0 0.0
    %708 = vmatpush1.msra.mxu0 0.0
    %709 = vmatprep.subr.mxu0 0.0
    %710 = vmatpush1.msra.mxu0 0.0
    %711 = vmatprep.subr.mxu0 0.0
    %712 = vmatpush1.msra.mxu0 0.0
    %713 = vmatprep.subr.mxu0 0.0
    %714 = vmatpush1.msra.mxu0 0.0
    %715 = vmatprep.subr.mxu0 0.0
    %716 = vmatpush1.msra.mxu0 0.0
    %v717 = vand.u32 %v200, 4294901760
    %718 = vmatprep.subr.mxu0 %v717
    %v719 = vand.u32 %v197, 4294901760
    %720 = vmatpush1.msra.mxu0 %v719
    %v721 = vand.u32 %v141, 4294901760
    %722 = vmatprep.subr.mxu0 %v721
    %v723 = vand.u32 %v105, 4294901760
    %724 = vmatpush1.msra.mxu0 %v723
    %v725 = vand.u32 %v140, 4294901760
    %726 = vmatprep.subr.mxu0 %v725
    %v727 = vand.u32 %v104, 4294901760
    %728 = vmatpush1.msra.mxu0 %v727
    %v729 = vand.u32 %v139, 4294901760
    %730 = vmatprep.subr.mxu0 %v729
    %v731 = vand.u32 %v103, 4294901760
    %732 = vmatpush1.msra.mxu0 %v731
    %v733 = vand.u32 %v138, 4294901760
    %734 = vmatprep.subr.mxu0 %v733
    %v735 = vand.u32 %v102, 4294901760
    %736 = vmatpush1.msra.mxu0 %v735
    %737 = vmatprep.subr.mxu0 0.0
    %738 = vmatpush2.msra.mxu0 0.0
    %739 = vmatprep.subr.mxu0 0.0
    %740 = vmatpush2.msra.mxu0 0.0
    %741 = vmatprep.subr.mxu0 0.0
    %742 = vmatpush2.msra.mxu0 0.0
    %743 = vmatprep.subr.mxu0 0.0
    %744 = vmatpush2.msra.mxu0 0.0
    %745 = vmatprep.subr.mxu0 0.0
    %746 = vmatpush2.msra.mxu0 0.0
    %747 = vmatprep.subr.mxu0 0.0
    %748 = vmatpush2.msra.mxu0 0.0
    %749 = vmatprep.subr.mxu0 0.0
    %750 = vmatpush2.msra.mxu0 0.0
    %751 = vmatprep.subr.mxu0 0.0
    %752 = vmatpush2.msra.mxu0 0.0
    %753 = vmatprep.subr.mxu0 0.0
    %754 = vmatpush2.msra.mxu0 0.0
    %755 = vmatprep.subr.mxu0 0.0
    %756 = vmatpush2.msra.mxu0 0.0
    %757 = vmatprep.subr.mxu0 0.0
    %758 = vmatpush2.msra.mxu0 0.0
    %759 = vmatprep.subr.mxu0 0.0
    %760 = vmatpush2.msra.mxu0 0.0
    %761 = vmatprep.subr.mxu0 0.0
    %762 = vmatpush2.msra.mxu0 0.0
    %763 = vmatprep.subr.mxu0 0.0
    %764 = vmatpush2.msra.mxu0 0.0
    %765 = vmatprep.subr.mxu0 0.0
    %766 = vmatpush2.msra.mxu0 0.0
    %767 = vmatprep.subr.mxu0 0.0
    %768 = vmatpush2.msra.mxu0 0.0
    %769 = vmatprep.mubr.f32.mxu0 0.0
    %v770 = vand.u32 %v193, 4294901760
    %771 = vmatmul.mubr.f32.gmra.mxu0 %v770
    %v772 = vpop.f32.mrf.mxu0
    %v773 = vadd.f32 %v691, %v772
    %v774 = vpop.f32.mrf.mxu0
    %v775 = vadd.f32 %v693, %v774
    %776 = vdwg.mxu0
    %777 = vmatprep.subr.mxu0 0.0
    %778 = vmatpush1.msra.mxu0 0.0
    %779 = vmatprep.subr.mxu0 0.0
    %780 = vmatpush1.msra.mxu0 0.0
    %781 = vmatprep.subr.mxu0 0.0
    %782 = vmatpush1.msra.mxu0 0.0
    %783 = vmatprep.subr.mxu0 0.0
    %784 = vmatpush1.msra.mxu0 0.0
    %785 = vmatprep.subr.mxu0 0.0
    %786 = vmatpush1.msra.mxu0 0.0
    %787 = vmatprep.subr.mxu0 0.0
    %788 = vmatpush1.msra.mxu0 0.0
    %789 = vmatprep.subr.mxu0 0.0
    %790 = vmatpush1.msra.mxu0 0.0
    %791 = vmatprep.subr.mxu0 0.0
    %792 = vmatpush1.msra.mxu0 0.0
    %793 = vmatprep.subr.mxu0 0.0
    %794 = vmatpush1.msra.mxu0 0.0
    %795 = vmatprep.subr.mxu0 0.0
    %796 = vmatpush1.msra.mxu0 0.0
    %797 = vmatprep.subr.mxu0 0.0
    %798 = vmatpush1.msra.mxu0 0.0
    %v799 = vand.u32 %v206, 4294901760
    %800 = vmatprep.subr.mxu0 %v799
    %v801 = vand.u32 %v203, 4294901760
    %802 = vmatpush1.msra.mxu0 %v801
    %v803 = vand.u32 %v188, 4294901760
    %804 = vmatprep.subr.mxu0 %v803
    %v805 = vand.u32 %v170, 4294901760
    %806 = vmatpush1.msra.mxu0 %v805
    %v807 = vand.u32 %v187, 4294901760
    %808 = vmatprep.subr.mxu0 %v807
    %v809 = vand.u32 %v141, 4294901760
    %810 = vmatpush1.msra.mxu0 %v809
    %v811 = vand.u32 %v186, 4294901760
    %812 = vmatprep.subr.mxu0 %v811
    %v813 = vand.u32 %v169, 4294901760
    %814 = vmatpush1.msra.mxu0 %v813
    %v815 = vand.u32 %v104, 4294901760
    %816 = vmatprep.subr.mxu0 %v815
    %v817 = vand.u32 %v168, 4294901760
    %818 = vmatpush1.msra.mxu0 %v817
    %819 = vmatprep.subr.mxu0 0.0
    %820 = vmatpush2.msra.mxu0 0.0
    %821 = vmatprep.subr.mxu0 0.0
    %822 = vmatpush2.msra.mxu0 0.0
    %823 = vmatprep.subr.mxu0 0.0
    %824 = vmatpush2.msra.mxu0 0.0
    %825 = vmatprep.subr.mxu0 0.0
    %826 = vmatpush2.msra.mxu0 0.0
    %827 = vmatprep.subr.mxu0 0.0
    %828 = vmatpush2.msra.mxu0 0.0
    %829 = vmatprep.subr.mxu0 0.0
    %830 = vmatpush2.msra.mxu0 0.0
    %831 = vmatprep.subr.mxu0 0.0
    %832 = vmatpush2.msra.mxu0 0.0
    %833 = vmatprep.subr.mxu0 0.0
    %834 = vmatpush2.msra.mxu0 0.0
    %835 = vmatprep.subr.mxu0 0.0
    %836 = vmatpush2.msra.mxu0 0.0
    %837 = vmatprep.subr.mxu0 0.0
    %838 = vmatpush2.msra.mxu0 0.0
    %839 = vmatprep.subr.mxu0 0.0
    %840 = vmatpush2.msra.mxu0 0.0
    %841 = vmatprep.subr.mxu0 0.0
    %842 = vmatpush2.msra.mxu0 0.0
    %843 = vmatprep.subr.mxu0 0.0
    %844 = vmatpush2.msra.mxu0 0.0
    %845 = vmatprep.subr.mxu0 0.0
    %846 = vmatpush2.msra.mxu0 0.0
    %847 = vmatprep.subr.mxu0 0.0
    %848 = vmatpush2.msra.mxu0 0.0
    %849 = vmatprep.subr.mxu0 0.0
    %850 = vmatpush2.msra.mxu0 0.0
    %851 = vmatprep.mubr.f32.mxu0 0.0
    %v852 = vand.u32 %v193, 4294901760
    %v853 = vsub.f32 %v193, %v852
    %v854 = vand.u32 %v853, 4294901760
    %v855 = vsub.f32 %v853, %v854
    %v856 = vand.u32 %v855, 4294901760
    %857 = vmatmul.mubr.f32.gmra.mxu0 %v856
    %v858 = vpop.f32.mrf.mxu0
    %v859 = vadd.f32 0.0, %v858
    %v860 = vpop.f32.mrf.mxu0
    %v861 = vadd.f32 0.0, %v860
    %862 = vdwg.mxu0
    %863 = vmatprep.subr.mxu0 0.0
    %864 = vmatpush1.msra.mxu0 0.0
    %865 = vmatprep.subr.mxu0 0.0
    %866 = vmatpush1.msra.mxu0 0.0
    %867 = vmatprep.subr.mxu0 0.0
    %868 = vmatpush1.msra.mxu0 0.0
    %869 = vmatprep.subr.mxu0 0.0
    %870 = vmatpush1.msra.mxu0 0.0
    %871 = vmatprep.subr.mxu0 0.0
    %872 = vmatpush1.msra.mxu0 0.0
    %873 = vmatprep.subr.mxu0 0.0
    %874 = vmatpush1.msra.mxu0 0.0
    %875 = vmatprep.subr.mxu0 0.0
    %876 = vmatpush1.msra.mxu0 0.0
    %877 = vmatprep.subr.mxu0 0.0
    %878 = vmatpush1.msra.mxu0 0.0
    %879 = vmatprep.subr.mxu0 0.0
    %880 = vmatpush1.msra.mxu0 0.0
    %881 = vmatprep.subr.mxu0 0.0
    %882 = vmatpush1.msra.mxu0 0.0
    %883 = vmatprep.subr.mxu0 0.0
    %884 = vmatpush1.msra.mxu0 0.0
    %v885 = vand.u32 %v206, 4294901760
    %v886 = vsub.f32 %v206, %v885
    %v887 = vand.u32 %v886, 4294901760
    %v888 = vsub.f32 %v886, %v887
    %v889 = vand.u32 %v888, 4294901760
    %890 = vmatprep.subr.mxu0 %v889
    %v891 = vand.u32 %v203, 4294901760
    %v892 = vsub.f32 %v203, %v891
    %v893 = vand.u32 %v892, 4294901760
    %v894 = vsub.f32 %v892, %v893
    %v895 = vand.u32 %v894, 4294901760
    %896 = vmatpush1.msra.mxu0 %v895
    %v897 = vand.u32 %v188, 4294901760
    %v898 = vsub.f32 %v188, %v897
    %v899 = vand.u32 %v898, 4294901760
    %v900 = vsub.f32 %v898, %v899
    %v901 = vand.u32 %v900, 4294901760
    %902 = vmatprep.subr.mxu0 %v901
    %v903 = vand.u32 %v170, 4294901760
    %v904 = vsub.f32 %v170, %v903
    %v905 = vand.u32 %v904, 4294901760
    %v906 = vsub.f32 %v904, %v905
    %v907 = vand.u32 %v906, 4294901760
    %908 = vmatpush1.msra.mxu0 %v907
    %v909 = vand.u32 %v187, 4294901760
    %v910 = vsub.f32 %v187, %v909
    %v911 = vand.u32 %v910, 4294901760
    %v912 = vsub.f32 %v910, %v911
    %v913 = vand.u32 %v912, 4294901760
    %914 = vmatprep.subr.mxu0 %v913
    %v915 = vand.u32 %v141, 4294901760
    %v916 = vsub.f32 %v141, %v915
    %v917 = vand.u32 %v916, 4294901760
    %v918 = vsub.f32 %v916, %v917
    %v919 = vand.u32 %v918, 4294901760
    %920 = vmatpush1.msra.mxu0 %v919
    %v921 = vand.u32 %v186, 4294901760
    %v922 = vsub.f32 %v186, %v921
    %v923 = vand.u32 %v922, 4294901760
    %v924 = vsub.f32 %v922, %v923
    %v925 = vand.u32 %v924, 4294901760
    %926 = vmatprep.subr.mxu0 %v925
    %v927 = vand.u32 %v169, 4294901760
    %v928 = vsub.f32 %v169, %v927
    %v929 = vand.u32 %v928, 4294901760
    %v930 = vsub.f32 %v928, %v929
    %v931 = vand.u32 %v930, 4294901760
    %932 = vmatpush1.msra.mxu0 %v931
    %v933 = vand.u32 %v104, 4294901760
    %v934 = vsub.f32 %v104, %v933
    %v935 = vand.u32 %v934, 4294901760
    %v936 = vsub.f32 %v934, %v935
    %v937 = vand.u32 %v936, 4294901760
    %938 = vmatprep.subr.mxu0 %v937
    %v939 = vand.u32 %v168, 4294901760
    %v940 = vsub.f32 %v168, %v939
    %v941 = vand.u32 %v940, 4294901760
    %v942 = vsub.f32 %v940, %v941
    %v943 = vand.u32 %v942, 4294901760
    %944 = vmatpush1.msra.mxu0 %v943
    %945 = vmatprep.subr.mxu0 0.0
    %946 = vmatpush2.msra.mxu0 0.0
    %947 = vmatprep.subr.mxu0 0.0
    %948 = vmatpush2.msra.mxu0 0.0
    %949 = vmatprep.subr.mxu0 0.0
    %950 = vmatpush2.msra.mxu0 0.0
    %951 = vmatprep.subr.mxu0 0.0
    %952 = vmatpush2.msra.mxu0 0.0
    %953 = vmatprep.subr.mxu0 0.0
    %954 = vmatpush2.msra.mxu0 0.0
    %955 = vmatprep.subr.mxu0 0.0
    %956 = vmatpush2.msra.mxu0 0.0
    %957 = vmatprep.subr.mxu0 0.0
    %958 = vmatpush2.msra.mxu0 0.0
    %959 = vmatprep.subr.mxu0 0.0
    %960 = vmatpush2.msra.mxu0 0.0
    %961 = vmatprep.subr.mxu0 0.0
    %962 = vmatpush2.msra.mxu0 0.0
    %963 = vmatprep.subr.mxu0 0.0
    %964 = vmatpush2.msra.mxu0 0.0
    %965 = vmatprep.subr.mxu0 0.0
    %966 = vmatpush2.msra.mxu0 0.0
    %967 = vmatprep.subr.mxu0 0.0
    %968 = vmatpush2.msra.mxu0 0.0
    %969 = vmatprep.subr.mxu0 0.0
    %970 = vmatpush2.msra.mxu0 0.0
    %971 = vmatprep.subr.mxu0 0.0
    %972 = vmatpush2.msra.mxu0 0.0
    %973 = vmatprep.subr.mxu0 0.0
    %974 = vmatpush2.msra.mxu0 0.0
    %975 = vmatprep.subr.mxu0 0.0
    %976 = vmatpush2.msra.mxu0 0.0
    %977 = vmatprep.mubr.f32.mxu0 0.0
    %v978 = vand.u32 %v193, 4294901760
    %979 = vmatmul.mubr.f32.gmra.mxu0 %v978
    %v980 = vpop.f32.mrf.mxu0
    %v981 = vadd.f32 %v859, %v980
    %v982 = vpop.f32.mrf.mxu0
    %v983 = vadd.f32 %v861, %v982
    %984 = vdwg.mxu0
    %985 = vmatprep.subr.mxu0 0.0
    %986 = vmatpush1.msra.mxu0 0.0
    %987 = vmatprep.subr.mxu0 0.0
    %988 = vmatpush1.msra.mxu0 0.0
    %989 = vmatprep.subr.mxu0 0.0
    %990 = vmatpush1.msra.mxu0 0.0
    %991 = vmatprep.subr.mxu0 0.0
    %992 = vmatpush1.msra.mxu0 0.0
    %993 = vmatprep.subr.mxu0 0.0
    %994 = vmatpush1.msra.mxu0 0.0
    %995 = vmatprep.subr.mxu0 0.0
    %996 = vmatpush1.msra.mxu0 0.0
    %997 = vmatprep.subr.mxu0 0.0
    %998 = vmatpush1.msra.mxu0 0.0
    %999 = vmatprep.subr.mxu0 0.0
    %1000 = vmatpush1.msra.mxu0 0.0
    %1001 = vmatprep.subr.mxu0 0.0
    %1002 = vmatpush1.msra.mxu0 0.0
    %1003 = vmatprep.subr.mxu0 0.0
    %1004 = vmatpush1.msra.mxu0 0.0
    %1005 = vmatprep.subr.mxu0 0.0
    %1006 = vmatpush1.msra.mxu0 0.0
    %v1007 = vand.u32 %v206, 4294901760
    %v1008 = vsub.f32 %v206, %v1007
    %1009 = vmatprep.subr.mxu0 %v1008
    %v1010 = vand.u32 %v203, 4294901760
    %v1011 = vsub.f32 %v203, %v1010
    %1012 = vmatpush1.msra.mxu0 %v1011
    %v1013 = vand.u32 %v188, 4294901760
    %v1014 = vsub.f32 %v188, %v1013
    %1015 = vmatprep.subr.mxu0 %v1014
    %v1016 = vand.u32 %v170, 4294901760
    %v1017 = vsub.f32 %v170, %v1016
    %1018 = vmatpush1.msra.mxu0 %v1017
    %v1019 = vand.u32 %v187, 4294901760
    %v1020 = vsub.f32 %v187, %v1019
    %1021 = vmatprep.subr.mxu0 %v1020
    %v1022 = vand.u32 %v141, 4294901760
    %v1023 = vsub.f32 %v141, %v1022
    %1024 = vmatpush1.msra.mxu0 %v1023
    %v1025 = vand.u32 %v186, 4294901760
    %v1026 = vsub.f32 %v186, %v1025
    %1027 = vmatprep.subr.mxu0 %v1026
    %v1028 = vand.u32 %v169, 4294901760
    %v1029 = vsub.f32 %v169, %v1028
    %1030 = vmatpush1.msra.mxu0 %v1029
    %v1031 = vand.u32 %v104, 4294901760
    %v1032 = vsub.f32 %v104, %v1031
    %1033 = vmatprep.subr.mxu0 %v1032
    %v1034 = vand.u32 %v168, 4294901760
    %v1035 = vsub.f32 %v168, %v1034
    %1036 = vmatpush1.msra.mxu0 %v1035
    %1037 = vmatprep.subr.mxu0 0.0
    %1038 = vmatpush2.msra.mxu0 0.0
    %1039 = vmatprep.subr.mxu0 0.0
    %1040 = vmatpush2.msra.mxu0 0.0
    %1041 = vmatprep.subr.mxu0 0.0
    %1042 = vmatpush2.msra.mxu0 0.0
    %1043 = vmatprep.subr.mxu0 0.0
    %1044 = vmatpush2.msra.mxu0 0.0
    %1045 = vmatprep.subr.mxu0 0.0
    %1046 = vmatpush2.msra.mxu0 0.0
    %1047 = vmatprep.subr.mxu0 0.0
    %1048 = vmatpush2.msra.mxu0 0.0
    %1049 = vmatprep.subr.mxu0 0.0
    %1050 = vmatpush2.msra.mxu0 0.0
    %1051 = vmatprep.subr.mxu0 0.0
    %1052 = vmatpush2.msra.mxu0 0.0
    %1053 = vmatprep.subr.mxu0 0.0
    %1054 = vmatpush2.msra.mxu0 0.0
    %1055 = vmatprep.subr.mxu0 0.0
    %1056 = vmatpush2.msra.mxu0 0.0
    %1057 = vmatprep.subr.mxu0 0.0
    %1058 = vmatpush2.msra.mxu0 0.0
    %1059 = vmatprep.subr.mxu0 0.0
    %1060 = vmatpush2.msra.mxu0 0.0
    %1061 = vmatprep.subr.mxu0 0.0
    %1062 = vmatpush2.msra.mxu0 0.0
    %1063 = vmatprep.subr.mxu0 0.0
    %1064 = vmatpush2.msra.mxu0 0.0
    %1065 = vmatprep.subr.mxu0 0.0
    %1066 = vmatpush2.msra.mxu0 0.0
    %1067 = vmatprep.subr.mxu0 0.0
    %1068 = vmatpush2.msra.mxu0 0.0
    %1069 = vmatprep.mubr.f32.mxu0 0.0
    %v1070 = vand.u32 %v193, 4294901760
    %v1071 = vsub.f32 %v193, %v1070
    %1072 = vmatmul.mubr.f32.gmra.mxu0 %v1071
    %v1073 = vpop.f32.mrf.mxu0
    %v1074 = vadd.f32 %v981, %v1073
    %v1075 = vpop.f32.mrf.mxu0
    %v1076 = vadd.f32 %v983, %v1075
    %1077 = vdwg.mxu0
    %1078 = vmatprep.subr.mxu0 0.0
    %1079 = vmatpush1.msra.mxu0 0.0
    %1080 = vmatprep.subr.mxu0 0.0
    %1081 = vmatpush1.msra.mxu0 0.0
    %1082 = vmatprep.subr.mxu0 0.0
    %1083 = vmatpush1.msra.mxu0 0.0
    %1084 = vmatprep.subr.mxu0 0.0
    %1085 = vmatpush1.msra.mxu0 0.0
    %1086 = vmatprep.subr.mxu0 0.0
    %1087 = vmatpush1.msra.mxu0 0.0
    %1088 = vmatprep.subr.mxu0 0.0
    %1089 = vmatpush1.msra.mxu0 0.0
    %1090 = vmatprep.subr.mxu0 0.0
    %1091 = vmatpush1.msra.mxu0 0.0
    %1092 = vmatprep.subr.mxu0 0.0
    %1093 = vmatpush1.msra.mxu0 0.0
    %1094 = vmatprep.subr.mxu0 0.0
    %1095 = vmatpush1.msra.mxu0 0.0
    %1096 = vmatprep.subr.mxu0 0.0
    %1097 = vmatpush1.msra.mxu0 0.0
    %1098 = vmatprep.subr.mxu0 0.0
    %1099 = vmatpush1.msra.mxu0 0.0
    %v1100 = vand.u32 %v206, 4294901760
    %1101 = vmatprep.subr.mxu0 %v1100
    %v1102 = vand.u32 %v203, 4294901760
    %1103 = vmatpush1.msra.mxu0 %v1102
    %v1104 = vand.u32 %v188, 4294901760
    %1105 = vmatprep.subr.mxu0 %v1104
    %v1106 = vand.u32 %v170, 4294901760
    %1107 = vmatpush1.msra.mxu0 %v1106
    %v1108 = vand.u32 %v187, 4294901760
    %1109 = vmatprep.subr.mxu0 %v1108
    %v1110 = vand.u32 %v141, 4294901760
    %1111 = vmatpush1.msra.mxu0 %v1110
    %v1112 = vand.u32 %v186, 4294901760
    %1113 = vmatprep.subr.mxu0 %v1112
    %v1114 = vand.u32 %v169, 4294901760
    %1115 = vmatpush1.msra.mxu0 %v1114
    %v1116 = vand.u32 %v104, 4294901760
    %1117 = vmatprep.subr.mxu0 %v1116
    %v1118 = vand.u32 %v168, 4294901760
    %1119 = vmatpush1.msra.mxu0 %v1118
    %1120 = vmatprep.subr.mxu0 0.0
    %1121 = vmatpush2.msra.mxu0 0.0
    %1122 = vmatprep.subr.mxu0 0.0
    %1123 = vmatpush2.msra.mxu0 0.0
    %1124 = vmatprep.subr.mxu0 0.0
    %1125 = vmatpush2.msra.mxu0 0.0
    %1126 = vmatprep.subr.mxu0 0.0
    %1127 = vmatpush2.msra.mxu0 0.0
    %1128 = vmatprep.subr.mxu0 0.0
    %1129 = vmatpush2.msra.mxu0 0.0
    %1130 = vmatprep.subr.mxu0 0.0
    %1131 = vmatpush2.msra.mxu0 0.0
    %1132 = vmatprep.subr.mxu0 0.0
    %1133 = vmatpush2.msra.mxu0 0.0
    %1134 = vmatprep.subr.mxu0 0.0
    %1135 = vmatpush2.msra.mxu0 0.0
    %1136 = vmatprep.subr.mxu0 0.0
    %1137 = vmatpush2.msra.mxu0 0.0
    %1138 = vmatprep.subr.mxu0 0.0
    %1139 = vmatpush2.msra.mxu0 0.0
    %1140 = vmatprep.subr.mxu0 0.0
    %1141 = vmatpush2.msra.mxu0 0.0
    %1142 = vmatprep.subr.mxu0 0.0
    %1143 = vmatpush2.msra.mxu0 0.0
    %1144 = vmatprep.subr.mxu0 0.0
    %1145 = vmatpush2.msra.mxu0 0.0
    %1146 = vmatprep.subr.mxu0 0.0
    %1147 = vmatpush2.msra.mxu0 0.0
    %1148 = vmatprep.subr.mxu0 0.0
    %1149 = vmatpush2.msra.mxu0 0.0
    %1150 = vmatprep.subr.mxu0 0.0
    %1151 = vmatpush2.msra.mxu0 0.0
    %1152 = vmatprep.mubr.f32.mxu0 0.0
    %v1153 = vand.u32 %v193, 4294901760
    %v1154 = vsub.f32 %v193, %v1153
    %v1155 = vand.u32 %v1154, 4294901760
    %1156 = vmatmul.mubr.f32.gmra.mxu0 %v1155
    %v1157 = vpop.f32.mrf.mxu0
    %v1158 = vadd.f32 %v1074, %v1157
    %v1159 = vpop.f32.mrf.mxu0
    %v1160 = vadd.f32 %v1076, %v1159
    %1161 = vdwg.mxu0
    %1162 = vmatprep.subr.mxu0 0.0
    %1163 = vmatpush1.msra.mxu0 0.0
    %1164 = vmatprep.subr.mxu0 0.0
    %1165 = vmatpush1.msra.mxu0 0.0
    %1166 = vmatprep.subr.mxu0 0.0
    %1167 = vmatpush1.msra.mxu0 0.0
    %1168 = vmatprep.subr.mxu0 0.0
    %1169 = vmatpush1.msra.mxu0 0.0
    %1170 = vmatprep.subr.mxu0 0.0
    %1171 = vmatpush1.msra.mxu0 0.0
    %1172 = vmatprep.subr.mxu0 0.0
    %1173 = vmatpush1.msra.mxu0 0.0
    %1174 = vmatprep.subr.mxu0 0.0
    %1175 = vmatpush1.msra.mxu0 0.0
    %1176 = vmatprep.subr.mxu0 0.0
    %1177 = vmatpush1.msra.mxu0 0.0
    %1178 = vmatprep.subr.mxu0 0.0
    %1179 = vmatpush1.msra.mxu0 0.0
    %1180 = vmatprep.subr.mxu0 0.0
    %1181 = vmatpush1.msra.mxu0 0.0
    %1182 = vmatprep.subr.mxu0 0.0
    %1183 = vmatpush1.msra.mxu0 0.0
    %v1184 = vand.u32 %v206, 4294901760
    %v1185 = vsub.f32 %v206, %v1184
    %v1186 = vand.u32 %v1185, 4294901760
    %1187 = vmatprep.subr.mxu0 %v1186
    %v1188 = vand.u32 %v203, 4294901760
    %v1189 = vsub.f32 %v203, %v1188
    %v1190 = vand.u32 %v1189, 4294901760
    %1191 = vmatpush1.msra.mxu0 %v1190
    %v1192 = vand.u32 %v188, 4294901760
    %v1193 = vsub.f32 %v188, %v1192
    %v1194 = vand.u32 %v1193, 4294901760
    %1195 = vmatprep.subr.mxu0 %v1194
    %v1196 = vand.u32 %v170, 4294901760
    %v1197 = vsub.f32 %v170, %v1196
    %v1198 = vand.u32 %v1197, 4294901760
    %1199 = vmatpush1.msra.mxu0 %v1198
    %v1200 = vand.u32 %v187, 4294901760
    %v1201 = vsub.f32 %v187, %v1200
    %v1202 = vand.u32 %v1201, 4294901760
    %1203 = vmatprep.subr.mxu0 %v1202
    %v1204 = vand.u32 %v141, 4294901760
    %v1205 = vsub.f32 %v141, %v1204
    %v1206 = vand.u32 %v1205, 4294901760
    %1207 = vmatpush1.msra.mxu0 %v1206
    %v1208 = vand.u32 %v186, 4294901760
    %v1209 = vsub.f32 %v186, %v1208
    %v1210 = vand.u32 %v1209, 4294901760
    %1211 = vmatprep.subr.mxu0 %v1210
    %v1212 = vand.u32 %v169, 4294901760
    %v1213 = vsub.f32 %v169, %v1212
    %v1214 = vand.u32 %v1213, 4294901760
    %1215 = vmatpush1.msra.mxu0 %v1214
    %v1216 = vand.u32 %v104, 4294901760
    %v1217 = vsub.f32 %v104, %v1216
    %v1218 = vand.u32 %v1217, 4294901760
    %1219 = vmatprep.subr.mxu0 %v1218
    %v1220 = vand.u32 %v168, 4294901760
    %v1221 = vsub.f32 %v168, %v1220
    %v1222 = vand.u32 %v1221, 4294901760
    %1223 = vmatpush1.msra.mxu0 %v1222
    %1224 = vmatprep.subr.mxu0 0.0
    %1225 = vmatpush2.msra.mxu0 0.0
    %1226 = vmatprep.subr.mxu0 0.0
    %1227 = vmatpush2.msra.mxu0 0.0
    %1228 = vmatprep.subr.mxu0 0.0
    %1229 = vmatpush2.msra.mxu0 0.0
    %1230 = vmatprep.subr.mxu0 0.0
    %1231 = vmatpush2.msra.mxu0 0.0
    %1232 = vmatprep.subr.mxu0 0.0
    %1233 = vmatpush2.msra.mxu0 0.0
    %1234 = vmatprep.subr.mxu0 0.0
    %1235 = vmatpush2.msra.mxu0 0.0
    %1236 = vmatprep.subr.mxu0 0.0
    %1237 = vmatpush2.msra.mxu0 0.0
    %1238 = vmatprep.subr.mxu0 0.0
    %1239 = vmatpush2.msra.mxu0 0.0
    %1240 = vmatprep.subr.mxu0 0.0
    %1241 = vmatpush2.msra.mxu0 0.0
    %1242 = vmatprep.subr.mxu0 0.0
    %1243 = vmatpush2.msra.mxu0 0.0
    %1244 = vmatprep.subr.mxu0 0.0
    %1245 = vmatpush2.msra.mxu0 0.0
    %1246 = vmatprep.subr.mxu0 0.0
    %1247 = vmatpush2.msra.mxu0 0.0
    %1248 = vmatprep.subr.mxu0 0.0
    %1249 = vmatpush2.msra.mxu0 0.0
    %1250 = vmatprep.subr.mxu0 0.0
    %1251 = vmatpush2.msra.mxu0 0.0
    %1252 = vmatprep.subr.mxu0 0.0
    %1253 = vmatpush2.msra.mxu0 0.0
    %1254 = vmatprep.subr.mxu0 0.0
    %1255 = vmatpush2.msra.mxu0 0.0
    %1256 = vmatprep.mubr.f32.mxu0 0.0
    %v1257 = vand.u32 %v193, 4294901760
    %1258 = vmatmul.mubr.f32.gmra.mxu0 %v1257
    %v1259 = vpop.f32.mrf.mxu0
    %v1260 = vadd.f32 %v1158, %v1259
    %v1261 = vpop.f32.mrf.mxu0
    %v1262 = vadd.f32 %v1160, %v1261
    %1263 = vdwg.mxu0
    %1264 = vmatprep.subr.mxu0 0.0
    %1265 = vmatpush1.msra.mxu0 0.0
    %1266 = vmatprep.subr.mxu0 0.0
    %1267 = vmatpush1.msra.mxu0 0.0
    %1268 = vmatprep.subr.mxu0 0.0
    %1269 = vmatpush1.msra.mxu0 0.0
    %1270 = vmatprep.subr.mxu0 0.0
    %1271 = vmatpush1.msra.mxu0 0.0
    %1272 = vmatprep.subr.mxu0 0.0
    %1273 = vmatpush1.msra.mxu0 0.0
    %1274 = vmatprep.subr.mxu0 0.0
    %1275 = vmatpush1.msra.mxu0 0.0
    %1276 = vmatprep.subr.mxu0 0.0
    %1277 = vmatpush1.msra.mxu0 0.0
    %1278 = vmatprep.subr.mxu0 0.0
    %1279 = vmatpush1.msra.mxu0 0.0
    %1280 = vmatprep.subr.mxu0 0.0
    %1281 = vmatpush1.msra.mxu0 0.0
    %1282 = vmatprep.subr.mxu0 0.0
    %1283 = vmatpush1.msra.mxu0 0.0
    %1284 = vmatprep.subr.mxu0 0.0
    %1285 = vmatpush1.msra.mxu0 0.0
    %v1286 = vand.u32 %v206, 4294901760
    %1287 = vmatprep.subr.mxu0 %v1286
    %v1288 = vand.u32 %v203, 4294901760
    %1289 = vmatpush1.msra.mxu0 %v1288
    %v1290 = vand.u32 %v188, 4294901760
    %1291 = vmatprep.subr.mxu0 %v1290
    %v1292 = vand.u32 %v170, 4294901760
    %1293 = vmatpush1.msra.mxu0 %v1292
    %v1294 = vand.u32 %v187, 4294901760
    %1295 = vmatprep.subr.mxu0 %v1294
    %v1296 = vand.u32 %v141, 4294901760
    %1297 = vmatpush1.msra.mxu0 %v1296
    %v1298 = vand.u32 %v186, 4294901760
    %1299 = vmatprep.subr.mxu0 %v1298
    %v1300 = vand.u32 %v169, 4294901760
    %1301 = vmatpush1.msra.mxu0 %v1300
    %v1302 = vand.u32 %v104, 4294901760
    %1303 = vmatprep.subr.mxu0 %v1302
    %v1304 = vand.u32 %v168, 4294901760
    %1305 = vmatpush1.msra.mxu0 %v1304
    %1306 = vmatprep.subr.mxu0 0.0
    %1307 = vmatpush2.msra.mxu0 0.0
    %1308 = vmatprep.subr.mxu0 0.0
    %1309 = vmatpush2.msra.mxu0 0.0
    %1310 = vmatprep.subr.mxu0 0.0
    %1311 = vmatpush2.msra.mxu0 0.0
    %1312 = vmatprep.subr.mxu0 0.0
    %1313 = vmatpush2.msra.mxu0 0.0
    %1314 = vmatprep.subr.mxu0 0.0
    %1315 = vmatpush2.msra.mxu0 0.0
    %1316 = vmatprep.subr.mxu0 0.0
    %1317 = vmatpush2.msra.mxu0 0.0
    %1318 = vmatprep.subr.mxu0 0.0
    %1319 = vmatpush2.msra.mxu0 0.0
    %1320 = vmatprep.subr.mxu0 0.0
    %1321 = vmatpush2.msra.mxu0 0.0
    %1322 = vmatprep.subr.mxu0 0.0
    %1323 = vmatpush2.msra.mxu0 0.0
    %1324 = vmatprep.subr.mxu0 0.0
    %1325 = vmatpush2.msra.mxu0 0.0
    %1326 = vmatprep.subr.mxu0 0.0
    %1327 = vmatpush2.msra.mxu0 0.0
    %1328 = vmatprep.subr.mxu0 0.0
    %1329 = vmatpush2.msra.mxu0 0.0
    %1330 = vmatprep.subr.mxu0 0.0
    %1331 = vmatpush2.msra.mxu0 0.0
    %1332 = vmatprep.subr.mxu0 0.0
    %1333 = vmatpush2.msra.mxu0 0.0
    %1334 = vmatprep.subr.mxu0 0.0
    %1335 = vmatpush2.msra.mxu0 0.0
    %1336 = vmatprep.subr.mxu0 0.0
    %1337 = vmatpush2.msra.mxu0 0.0
    %1338 = vmatprep.mubr.f32.mxu0 0.0
    %v1339 = vand.u32 %v193, 4294901760
    %1340 = vmatmul.mubr.f32.gmra.mxu0 %v1339
    %v1341 = vpop.f32.mrf.mxu0
    %v1342 = vadd.f32 %v1260, %v1341
    %v1343 = vpop.f32.mrf.mxu0
    %v1344 = vadd.f32 %v1262, %v1343
    %1345 = vdwg.mxu0
    %v1346 = vmax.f32 %v773, %v775
    %v1347 = vmax.f32 %v1342, %v1344
    %v1348 = vmax.f32 %v1346, %v1347
    %v1349 = vmul.f32 %v1348, 0.1
    %v1350 = vmax.f32 %v1348, %v1349
    %1351 = vst [vmem:[#allocation8] sm:$0xff] %v1350
    // Predicated region
    $region26: #{tpu_custom_call.1} parent=1 // pred_check
      _
    $region27: #{tpu_custom_call.1} parent=1 // pred_check_branch
      %1353 = sbr.rel (0) target = $region29
    $region28: #{tpu_custom_call.1} parent=1 // pred_region
      %s1355 = ssub.s32 128, 128
      %1356 = vsyncadd [#allocation4], %s1355
      %s1358 = sshll.u32 [#allocation8], 4
      %s1359 = int_to_ptr.vmem [resolvable:$true] %s1358
      %1361 = dma.vmem_to_hbm [thread:$0]  %s1359, 128, %s3, [#allocation4]
    $region29: #{tpu_custom_call.1} parent=1 // pred_fallthru
      _
    // Predicated region
    $region30: #{tpu_custom_call.1} parent=1 // pred_check
      _
    $region31: #{tpu_custom_call.1} parent=1 // pred_check_branch
      %1363 = sbr.rel (0) target = $region33
    $region32: #{tpu_custom_call.1} parent=1 // pred_region
      %1364 = dma.done [#allocation4], 128
    $region33: #{tpu_custom_call.1} parent=1 // pred_fallthru
      _
    %1365 = vsyncpa [#allocation3], 1
    %1366 = vsyncpa [#allocation6], 1
    %1367 = vsyncpa [#allocation4], 1

</llo_original>
